<compile_context>
chip_gen: v5e
topology: v5e:2x2
jax: 0.10.0
libtpu: 0.0.40
codegen_flags: <defaults>
</compile_context>

<pallas_src>
import functools

import jax
import jax.numpy as jnp
from jax import lax
from jax.experimental import pallas as pl
from jax.experimental.pallas import tpu as pltpu


# ---------------------------------------------------------------------------
# Tiling helpers
# ---------------------------------------------------------------------------

def _pick_time_chunk(seq_len):
    """Time-chunk size Tc: prefer a divisor of S (no padded steps), else pad+mask with 8."""
    for tc in (32, 16, 8):
        if seq_len % tc == 0:
            return tc
    return 8


def _pick_batch_block(b_pad):
    """Sublane-aligned batch block; >=2 blocks when possible so v7x megacore can split them."""
    if b_pad <= 8:
        return b_pad
    half = b_pad // 2
    return half if half % 8 == 0 else 8


# ---------------------------------------------------------------------------
# Fused GRU kernel: per grid step = one (batch block, time chunk)
# ---------------------------------------------------------------------------

def _gru_fused_kernel(x_ref, wih_ref, gib_ref, whh_ref, bhn_ref, o_ref, gi_buf,
                      *, hidden_dim, time_chunk, seq_len, masked_tail):
    """x_ref:  (Tc, Bblk, D) f32 time-major chunk of the input
       wih_ref:(D, 3H) bf16   = W_ih^T
       gib_ref:(1, 3H) f32    = b_ih with the r/z slices of b_hh folded in
       whh_ref:(H, 3H) f32    = W_hh^T
       bhn_ref:(1, H)  f32    = b_hh n-gate slice
       o_ref:  (Bblk, H) f32  resident hidden-state accumulator across the time axis
       gi_buf: (Tc*Bblk, 3H) f32 VMEM scratch for the chunk's input projections
    """
    H = hidden_dim
    Tc = time_chunk
    c = pl.program_id(1)
    Bblk = o_ref.shape[0]

    @pl.when(c == 0)
    def _init():
        o_ref[...] = jnp.zeros_like(o_ref)

    # ---- Fused input projection for the whole chunk: one bf16 MXU matmul ----
    xc = x_ref[...]                                       # (Tc, Bblk, D) f32
    x2 = xc.reshape(Tc * Bblk, xc.shape[-1])              # free merge (Bblk multiple of 8)
    gi = jnp.dot(x2.astype(jnp.bfloat16), wih_ref[...],
                 preferred_element_type=jnp.float32)
    gi_buf[...] = gi + gib_ref[...]                       # biases (b_ih + b_hh[r,z]) folded

    # ---- Serial recurrence over the chunk; h carried in vregs, not VMEM ----
    def step(t, h):
        row = pl.multiple_of(t * Bblk, Bblk)
        gi_t = gi_buf[pl.ds(row, Bblk), :]                # (Bblk, 3H) this step's gi
        gh = jnp.dot(h, whh_ref[...],                     # f32 recurrent matmul (no bf16 drift)
                     preferred_element_type=jnp.float32)  # (Bblk, 3H)
        r = jax.nn.sigmoid(gi_t[:, 0:H] + gh[:, 0:H])
        z = jax.nn.sigmoid(gi_t[:, H:2 * H] + gh[:, H:2 * H])
        n = jnp.tanh(gi_t[:, 2 * H:3 * H] + r * (gh[:, 2 * H:3 * H] + bhn_ref[...]))
        h_new = (1.0 - z) * n + z * h
        if masked_tail:
            # Ignore zero-padded timesteps past the true sequence length.
            h_new = jnp.where(c * Tc + t < seq_len, h_new, h)
        return h_new

    o_ref[...] = lax.fori_loop(0, Tc, step, o_ref[...], unroll=True)


# ---------------------------------------------------------------------------
# SequenceEncoder forward (mirrors: _, h_n = self.gru(x); return h_n.squeeze(0))
# ---------------------------------------------------------------------------

def sequence_encoder_forward(params, x):
    """x: (batch, seq, input_dim) f32 -> (batch, hidden_dim) f32."""
    B, S, D = x.shape
    H = params["whh_t"].shape[0]

    Tc = _pick_time_chunk(S)
    S_pad = ((S + Tc - 1) // Tc) * Tc
    B_pad = ((B + 7) // 8) * 8
    Bblk = _pick_batch_block(B_pad)

    # Small one-pass XLA transpose of the f32 input to time-major; gi itself never hits HBM.
    x_tm = jnp.transpose(x, (1, 0, 2))
    if S_pad != S or B_pad != B:
        x_tm = jnp.pad(x_tm, ((0, S_pad - S), (0, B_pad - B), (0, 0)))

    # Fold b_ih (+ r/z slices of b_hh) into the hoisted bias; keep b_hh_n on the serial path.
    gi_bias = params["bih"] + jnp.concatenate(
        [params["bhh"][:2 * H], jnp.zeros((H,), jnp.float32)])
    bhh_n = params["bhh"][2 * H:]

    grid = (B_pad // Bblk, S_pad // Tc)
    kernel = functools.partial(
        _gru_fused_kernel, hidden_dim=H, time_chunk=Tc,
        seq_len=S, masked_tail=(S_pad != S))

    # TODO(synk): for large D/H on v7x (64 MiB VMEM), tile the 3H dimension of the weights
    # with an extra grid axis instead of keeping both full weight matrices resident.
    h_pad = pl.pallas_call(
        kernel,
        out_shape=jax.ShapeDtypeStruct((B_pad, H), jnp.float32),
        grid=grid,
        in_specs=[
            pl.BlockSpec((Tc, Bblk, D), lambda b, c: (c, b, 0)),   # x chunk, pipelined
            pl.BlockSpec((D, 3 * H), lambda b, c: (0, 0)),         # W_ih^T resident
            pl.BlockSpec((1, 3 * H), lambda b, c: (0, 0)),         # folded gi bias
            pl.BlockSpec((H, 3 * H), lambda b, c: (0, 0)),         # W_hh^T resident
            pl.BlockSpec((1, H), lambda b, c: (0, 0)),             # b_hh n-slice
        ],
        out_specs=pl.BlockSpec((Bblk, H), lambda b, c: (b, 0)),    # resident across time
        scratch_shapes=[pltpu.VMEM((Tc * Bblk, 3 * H), jnp.float32)],
        compiler_params=pltpu.CompilerParams(
            dimension_semantics=("parallel", "arbitrary")),
    )(x_tm, params["wih_t"], gi_bias.reshape(1, 3 * H),
      params["whh_t"], bhh_n.reshape(1, H))

    return h_pad[:B]


# ---------------------------------------------------------------------------
# Parameters (PyTorch nn.GRU init: U(-1/sqrt(H), 1/sqrt(H)); gate order r, z, n)
# ---------------------------------------------------------------------------

def init_params(key, input_dim, hidden_dim):
    ks = jax.random.split(key, 4)
    bound = 1.0 / float(hidden_dim) ** 0.5

    def u(k, shape):
        return jax.random.uniform(k, shape, jnp.float32, -bound, bound)

    w_ih = u(ks[0], (3 * hidden_dim, input_dim))    # torch weight_ih_l0
    w_hh = u(ks[1], (3 * hidden_dim, hidden_dim))   # torch weight_hh_l0
    b_ih = u(ks[2], (3 * hidden_dim,))
    b_hh = u(ks[3], (3 * hidden_dim,))
    return {
        "wih_t": w_ih.T.astype(jnp.bfloat16),       # (D, 3H) bf16 MXU operand (projection)
        "whh_t": w_hh.T.astype(jnp.float32),        # (H, 3H) f32  (recurrent path, no drift)
        "bih": b_ih,                                # (3H,) f32
        "bhh": b_hh,                                # (3H,) f32
    }


# ---------------------------------------------------------------------------
# Pure-JAX reference (f32) for validation
# ---------------------------------------------------------------------------

def gru_reference(x, wih_t, whh_t, bih, bhh):
    B, S, D = x.shape
    H = whh_t.shape[1] // 3

    def step(h, xt):
        gi = xt @ wih_t + bih
        gh = h @ whh_t + bhh
        r = jax.nn.sigmoid(gi[:, 0:H] + gh[:, 0:H])
        z = jax.nn.sigmoid(gi[:, H:2 * H] + gh[:, H:2 * H])
        n = jnp.tanh(gi[:, 2 * H:3 * H] + r * gh[:, 2 * H:3 * H])
        return (1.0 - z) * n + z * h, None

    h0 = jnp.zeros((B, H), jnp.float32)
    hT, _ = jax.lax.scan(step, h0, jnp.swapaxes(x, 0, 1))
    return hT


if __name__ == "__main__":
    key = jax.random.PRNGKey(0)
    pkey, xkey = jax.random.split(key)

    # Small shapes consistent with the module. seq=12 deliberately exercises the
    # pad-and-mask tail; batch=4 exercises the batch padding; D=H=128 keeps lanes dense.
    batch, seq, input_dim, hidden_dim = 4, 12, 128, 128

    params = init_params(pkey, input_dim, hidden_dim)
    x = jax.random.normal(xkey, (batch, seq, input_dim), jnp.float32)

    fwd = jax.jit(sequence_encoder_forward)
    h_n = jax.block_until_ready(fwd(params, x))

    assert h_n.shape == (batch, hidden_dim), h_n.shape
    assert bool(jnp.all(jnp.isfinite(h_n)))

    # Reference uses the same (bf16-rounded) W_ih upcast to f32 and the exact f32 W_hh,
    # so the only deviation comes from bf16 projection operands (f32 accumulation).
    ref = gru_reference(
        x,
        params["wih_t"].astype(jnp.float32),
        params["whh_t"],
        params["bih"], params["bhh"],
    )
    max_err = float(jnp.max(jnp.abs(h_n - ref)))
    assert max_err < 5e-2, f"max abs err vs reference: {max_err}"

    print("KERNEL_OK")
</pallas_src>

<mosaic_0001>
module attributes {stable_mosaic.version = 11 : i64} {
  func.func @_gru_fused_kernel(%arg0: i32, %arg1: i32, %arg2: memref<8x8x128xf32, #tpu.memory_space<vmem>>, %arg3: memref<128x384xbf16, #tpu.memory_space<vmem>>, %arg4: memref<1x384xf32, #tpu.memory_space<vmem>>, %arg5: memref<128x384xf32, #tpu.memory_space<vmem>>, %arg6: memref<1x128xf32, #tpu.memory_space<vmem>>, %arg7: memref<8x128xf32, #tpu.memory_space<vmem>>, %arg8: memref<64x384xf32, #tpu.memory_space<vmem>>) attributes {dimension_semantics = [#tpu.dimension_semantics<parallel>, #tpu.dimension_semantics<arbitrary>], iteration_bounds = array<i64: 1, 2>, scalar_prefetch = 0 : i64, scratch_operands = 1 : i64, tpu.core_type = #tpu.core_type<tc>, window_params = [{transform_indices = @transform_0, window_bounds = array<i64: 8, 8, 128>}, {pipeline_mode = #tpu.pipeline_mode<synchronous>, transform_indices = @transform_1, window_bounds = array<i64: 128, 384>}, {pipeline_mode = #tpu.pipeline_mode<synchronous>, transform_indices = @transform_2, window_bounds = array<i64: 1, 384>}, {pipeline_mode = #tpu.pipeline_mode<synchronous>, transform_indices = @transform_3, window_bounds = array<i64: 128, 384>}, {pipeline_mode = #tpu.pipeline_mode<synchronous>, transform_indices = @transform_4, window_bounds = array<i64: 1, 128>}, {transform_indices = @transform_5, window_bounds = array<i64: 8, 128>}]} {
    %c0_i32 = arith.constant 0 : i32
    %0 = arith.cmpi eq, %arg1, %c0_i32 : i32
    %1 = arith.extui %0 : i1 to i32
    %c0_i32_0 = arith.constant 0 : i32
    %2 = arith.cmpi ne, %1, %c0_i32_0 : i32
    scf.if %2 {
      %cst_109 = arith.constant 0.000000e+00 : f32
      %326 = vector.broadcast %cst_109 : f32 to vector<8x128xf32>
      %c0_110 = arith.constant 0 : index
      %c0_111 = arith.constant 0 : index
      %327 = vector.load %arg7[%c0_110, %c0_111] : memref<8x128xf32, #tpu.memory_space<vmem>>, vector<8x128xf32>
      tpu.vector_store %arg7[%c0_110, %c0_111], %326 {strides = array<i32>} : memref<8x128xf32, #tpu.memory_space<vmem>>, vector<8x128xf32>,
    } else {
    }
    %c0 = arith.constant 0 : index
    %c0_1 = arith.constant 0 : index
    %c0_2 = arith.constant 0 : index
    %3 = vector.load %arg2[%c0, %c0_1, %c0_2] : memref<8x8x128xf32, #tpu.memory_space<vmem>>, vector<8x8x128xf32>
    %4 = vector.shape_cast %3 : vector<8x8x128xf32> to vector<64x128xf32>
    %5 = arith.truncf %4 : vector<64x128xf32> to vector<64x128xbf16>
    %c0_3 = arith.constant 0 : index
    %c0_4 = arith.constant 0 : index
    %6 = vector.load %arg3[%c0_3, %c0_4] : memref<128x384xbf16, #tpu.memory_space<vmem>>, vector<128x384xbf16>
    %cst = arith.constant dense<0.000000e+00> : vector<64x384xf32>
    %7 = tpu.matmul %5, %6, %cst {dimension_numbers = #tpu.dot_dimension_numbers<[1], [0], [0], [1], [0, 0, 1, 1], [], []>} : vector<64x128xbf16>, vector<128x384xbf16>, vector<64x384xf32> -> vector<64x384xf32>
    %c0_5 = arith.constant 0 : index
    %c0_6 = arith.constant 0 : index
    %8 = vector.load %arg4[%c0_5, %c0_6] : memref<1x384xf32, #tpu.memory_space<vmem>>, vector<1x384xf32>
    %9 = vector.broadcast %8 : vector<1x384xf32> to vector<64x384xf32>
    %10 = arith.addf %7, %9 : vector<64x384xf32>
    %c0_7 = arith.constant 0 : index
    %c0_8 = arith.constant 0 : index
    %11 = vector.load %arg8[%c0_7, %c0_8] : memref<64x384xf32, #tpu.memory_space<vmem>>, vector<64x384xf32>
    tpu.vector_store %arg8[%c0_7, %c0_8], %10 {strides = array<i32>} : memref<64x384xf32, #tpu.memory_space<vmem>>, vector<64x384xf32>,
    %c0_9 = arith.constant 0 : index
    %c0_10 = arith.constant 0 : index
    %12 = vector.load %arg7[%c0_9, %c0_10] : memref<8x128xf32, #tpu.memory_space<vmem>>, vector<8x128xf32>
    %c0_i32_11 = arith.constant 0 : i32
    %c8_i32 = arith.constant 8 : i32
    %13 = arith.muli %c0_i32_11, %c8_i32 : i32
    %14 = tpu.assume_multiple %13, 8 : i32
    %15 = arith.index_cast %14 : i32 to index
    %c0_12 = arith.constant 0 : index
    %16 = vector.load %arg8[%15, %c0_12] : memref<64x384xf32, #tpu.memory_space<vmem>>, vector<8x384xf32>
    %c0_13 = arith.constant 0 : index
    %c0_14 = arith.constant 0 : index
    %17 = vector.load %arg5[%c0_13, %c0_14] : memref<128x384xf32, #tpu.memory_space<vmem>>, vector<128x384xf32>
    %cst_15 = arith.constant dense<0.000000e+00> : vector<8x384xf32>
    %18 = tpu.matmul %12, %17, %cst_15 {dimension_numbers = #tpu.dot_dimension_numbers<[1], [0], [0], [1], [0, 0, 1, 1], [], []>} : vector<8x128xf32>, vector<128x384xf32>, vector<8x384xf32> -> vector<8x384xf32>
    %19 = vector.extract_strided_slice %16 {offsets = [0, 0], sizes = [8, 128], strides = [1, 1]} : vector<8x384xf32> to vector<8x128xf32>
    %20 = vector.extract_strided_slice %18 {offsets = [0, 0], sizes = [8, 128], strides = [1, 1]} : vector<8x384xf32> to vector<8x128xf32>
    %21 = arith.addf %19, %20 : vector<8x128xf32>
    %22 = arith.negf %21 : vector<8x128xf32>
    %23 = math.exp %22 : vector<8x128xf32>
    %cst_16 = arith.constant 1.000000e+00 : f32
    %24 = vector.broadcast %cst_16 : f32 to vector<8x128xf32>
    %25 = arith.addf %24, %23 : vector<8x128xf32>
    %26 = arith.divf %24, %25 : vector<8x128xf32>
    %27 = vector.extract_strided_slice %16 {offsets = [0, 128], sizes = [8, 128], strides = [1, 1]} : vector<8x384xf32> to vector<8x128xf32>
    %28 = vector.extract_strided_slice %18 {offsets = [0, 128], sizes = [8, 128], strides = [1, 1]} : vector<8x384xf32> to vector<8x128xf32>
    %29 = arith.addf %27, %28 : vector<8x128xf32>
    %30 = arith.negf %29 : vector<8x128xf32>
    %31 = math.exp %30 : vector<8x128xf32>
    %cst_17 = arith.constant 1.000000e+00 : f32
    %32 = vector.broadcast %cst_17 : f32 to vector<8x128xf32>
    %33 = arith.addf %32, %31 : vector<8x128xf32>
    %34 = arith.divf %32, %33 : vector<8x128xf32>
    %35 = vector.extract_strided_slice %16 {offsets = [0, 256], sizes = [8, 128], strides = [1, 1]} : vector<8x384xf32> to vector<8x128xf32>
    %36 = vector.extract_strided_slice %18 {offsets = [0, 256], sizes = [8, 128], strides = [1, 1]} : vector<8x384xf32> to vector<8x128xf32>
    %c0_18 = arith.constant 0 : index
    %c0_19 = arith.constant 0 : index
    %37 = vector.load %arg6[%c0_18, %c0_19] : memref<1x128xf32, #tpu.memory_space<vmem>>, vector<1x128xf32>
    %38 = vector.broadcast %37 : vector<1x128xf32> to vector<8x128xf32>
    %39 = arith.addf %36, %38 : vector<8x128xf32>
    %40 = arith.mulf %26, %39 : vector<8x128xf32>
    %41 = arith.addf %35, %40 : vector<8x128xf32>
    %42 = math.tanh %41 : vector<8x128xf32>
    %cst_20 = arith.constant 1.000000e+00 : f32
    %43 = vector.broadcast %cst_20 : f32 to vector<8x128xf32>
    %44 = arith.subf %43, %34 : vector<8x128xf32>
    %45 = arith.mulf %44, %42 : vector<8x128xf32>
    %46 = arith.mulf %34, %12 : vector<8x128xf32>
    %47 = arith.addf %45, %46 : vector<8x128xf32>
    %c8_i32_21 = arith.constant 8 : i32
    %48 = arith.muli %arg1, %c8_i32_21 : i32
    %49 = arith.addi %48, %c0_i32_11 : i32
    %c12_i32 = arith.constant 12 : i32
    %50 = arith.cmpi slt, %49, %c12_i32 : i32
    %51 = arith.select %50, %47, %12 : vector<8x128xf32>
    %c1_i32 = arith.constant 1 : i32
    %c8_i32_22 = arith.constant 8 : i32
    %52 = arith.muli %c1_i32, %c8_i32_22 : i32
    %53 = tpu.assume_multiple %52, 8 : i32
    %54 = arith.index_cast %53 : i32 to index
    %c0_23 = arith.constant 0 : index
    %55 = vector.load %arg8[%54, %c0_23] : memref<64x384xf32, #tpu.memory_space<vmem>>, vector<8x384xf32>
    %c0_24 = arith.constant 0 : index
    %c0_25 = arith.constant 0 : index
    %56 = vector.load %arg5[%c0_24, %c0_25] : memref<128x384xf32, #tpu.memory_space<vmem>>, vector<128x384xf32>
    %cst_26 = arith.constant dense<0.000000e+00> : vector<8x384xf32>
    %57 = tpu.matmul %51, %56, %cst_26 {dimension_numbers = #tpu.dot_dimension_numbers<[1], [0], [0], [1], [0, 0, 1, 1], [], []>} : vector<8x128xf32>, vector<128x384xf32>, vector<8x384xf32> -> vector<8x384xf32>
    %58 = vector.extract_strided_slice %55 {offsets = [0, 0], sizes = [8, 128], strides = [1, 1]} : vector<8x384xf32> to vector<8x128xf32>
    %59 = vector.extract_strided_slice %57 {offsets = [0, 0], sizes = [8, 128], strides = [1, 1]} : vector<8x384xf32> to vector<8x128xf32>
    %60 = arith.addf %58, %59 : vector<8x128xf32>
    %61 = arith.negf %60 : vector<8x128xf32>
    %62 = math.exp %61 : vector<8x128xf32>
    %cst_27 = arith.constant 1.000000e+00 : f32
    %63 = vector.broadcast %cst_27 : f32 to vector<8x128xf32>
    %64 = arith.addf %63, %62 : vector<8x128xf32>
    %65 = arith.divf %63, %64 : vector<8x128xf32>
    %66 = vector.extract_strided_slice %55 {offsets = [0, 128], sizes = [8, 128], strides = [1, 1]} : vector<8x384xf32> to vector<8x128xf32>
    %67 = vector.extract_strided_slice %57 {offsets = [0, 128], sizes = [8, 128], strides = [1, 1]} : vector<8x384xf32> to vector<8x128xf32>
    %68 = arith.addf %66, %67 : vector<8x128xf32>
    %69 = arith.negf %68 : vector<8x128xf32>
    %70 = math.exp %69 : vector<8x128xf32>
    %cst_28 = arith.constant 1.000000e+00 : f32
    %71 = vector.broadcast %cst_28 : f32 to vector<8x128xf32>
    %72 = arith.addf %71, %70 : vector<8x128xf32>
    %73 = arith.divf %71, %72 : vector<8x128xf32>
    %74 = vector.extract_strided_slice %55 {offsets = [0, 256], sizes = [8, 128], strides = [1, 1]} : vector<8x384xf32> to vector<8x128xf32>
    %75 = vector.extract_strided_slice %57 {offsets = [0, 256], sizes = [8, 128], strides = [1, 1]} : vector<8x384xf32> to vector<8x128xf32>
    %c0_29 = arith.constant 0 : index
    %c0_30 = arith.constant 0 : index
    %76 = vector.load %arg6[%c0_29, %c0_30] : memref<1x128xf32, #tpu.memory_space<vmem>>, vector<1x128xf32>
    %77 = vector.broadcast %76 : vector<1x128xf32> to vector<8x128xf32>
    %78 = arith.addf %75, %77 : vector<8x128xf32>
    %79 = arith.mulf %65, %78 : vector<8x128xf32>
    %80 = arith.addf %74, %79 : vector<8x128xf32>
    %81 = math.tanh %80 : vector<8x128xf32>
    %cst_31 = arith.constant 1.000000e+00 : f32
    %82 = vector.broadcast %cst_31 : f32 to vector<8x128xf32>
    %83 = arith.subf %82, %73 : vector<8x128xf32>
    %84 = arith.mulf %83, %81 : vector<8x128xf32>
    %85 = arith.mulf %73, %51 : vector<8x128xf32>
    %86 = arith.addf %84, %85 : vector<8x128xf32>
    %c8_i32_32 = arith.constant 8 : i32
    %87 = arith.muli %arg1, %c8_i32_32 : i32
    %88 = arith.addi %87, %c1_i32 : i32
    %c12_i32_33 = arith.constant 12 : i32
    %89 = arith.cmpi slt, %88, %c12_i32_33 : i32
    %90 = arith.select %89, %86, %51 : vector<8x128xf32>
    %c2_i32 = arith.constant 2 : i32
    %c8_i32_34 = arith.constant 8 : i32
    %91 = arith.muli %c2_i32, %c8_i32_34 : i32
    %92 = tpu.assume_multiple %91, 8 : i32
    %93 = arith.index_cast %92 : i32 to index
    %c0_35 = arith.constant 0 : index
    %94 = vector.load %arg8[%93, %c0_35] : memref<64x384xf32, #tpu.memory_space<vmem>>, vector<8x384xf32>
    %c0_36 = arith.constant 0 : index
    %c0_37 = arith.constant 0 : index
    %95 = vector.load %arg5[%c0_36, %c0_37] : memref<128x384xf32, #tpu.memory_space<vmem>>, vector<128x384xf32>
    %cst_38 = arith.constant dense<0.000000e+00> : vector<8x384xf32>
    %96 = tpu.matmul %90, %95, %cst_38 {dimension_numbers = #tpu.dot_dimension_numbers<[1], [0], [0], [1], [0, 0, 1, 1], [], []>} : vector<8x128xf32>, vector<128x384xf32>, vector<8x384xf32> -> vector<8x384xf32>
    %97 = vector.extract_strided_slice %94 {offsets = [0, 0], sizes = [8, 128], strides = [1, 1]} : vector<8x384xf32> to vector<8x128xf32>
    %98 = vector.extract_strided_slice %96 {offsets = [0, 0], sizes = [8, 128], strides = [1, 1]} : vector<8x384xf32> to vector<8x128xf32>
    %99 = arith.addf %97, %98 : vector<8x128xf32>
    %100 = arith.negf %99 : vector<8x128xf32>
    %101 = math.exp %100 : vector<8x128xf32>
    %cst_39 = arith.constant 1.000000e+00 : f32
    %102 = vector.broadcast %cst_39 : f32 to vector<8x128xf32>
    %103 = arith.addf %102, %101 : vector<8x128xf32>
    %104 = arith.divf %102, %103 : vector<8x128xf32>
    %105 = vector.extract_strided_slice %94 {offsets = [0, 128], sizes = [8, 128], strides = [1, 1]} : vector<8x384xf32> to vector<8x128xf32>
    %106 = vector.extract_strided_slice %96 {offsets = [0, 128], sizes = [8, 128], strides = [1, 1]} : vector<8x384xf32> to vector<8x128xf32>
    %107 = arith.addf %105, %106 : vector<8x128xf32>
    %108 = arith.negf %107 : vector<8x128xf32>
    %109 = math.exp %108 : vector<8x128xf32>
    %cst_40 = arith.constant 1.000000e+00 : f32
    %110 = vector.broadcast %cst_40 : f32 to vector<8x128xf32>
    %111 = arith.addf %110, %109 : vector<8x128xf32>
    %112 = arith.divf %110, %111 : vector<8x128xf32>
    %113 = vector.extract_strided_slice %94 {offsets = [0, 256], sizes = [8, 128], strides = [1, 1]} : vector<8x384xf32> to vector<8x128xf32>
    %114 = vector.extract_strided_slice %96 {offsets = [0, 256], sizes = [8, 128], strides = [1, 1]} : vector<8x384xf32> to vector<8x128xf32>
    %c0_41 = arith.constant 0 : index
    %c0_42 = arith.constant 0 : index
    %115 = vector.load %arg6[%c0_41, %c0_42] : memref<1x128xf32, #tpu.memory_space<vmem>>, vector<1x128xf32>
    %116 = vector.broadcast %115 : vector<1x128xf32> to vector<8x128xf32>
    %117 = arith.addf %114, %116 : vector<8x128xf32>
    %118 = arith.mulf %104, %117 : vector<8x128xf32>
    %119 = arith.addf %113, %118 : vector<8x128xf32>
    %120 = math.tanh %119 : vector<8x128xf32>
    %cst_43 = arith.constant 1.000000e+00 : f32
    %121 = vector.broadcast %cst_43 : f32 to vector<8x128xf32>
    %122 = arith.subf %121, %112 : vector<8x128xf32>
    %123 = arith.mulf %122, %120 : vector<8x128xf32>
    %124 = arith.mulf %112, %90 : vector<8x128xf32>
    %125 = arith.addf %123, %124 : vector<8x128xf32>
    %c8_i32_44 = arith.constant 8 : i32
    %126 = arith.muli %arg1, %c8_i32_44 : i32
    %127 = arith.addi %126, %c2_i32 : i32
    %c12_i32_45 = arith.constant 12 : i32
    %128 = arith.cmpi slt, %127, %c12_i32_45 : i32
    %129 = arith.select %128, %125, %90 : vector<8x128xf32>
    %c3_i32 = arith.constant 3 : i32
    %c8_i32_46 = arith.constant 8 : i32
    %130 = arith.muli %c3_i32, %c8_i32_46 : i32
    %131 = tpu.assume_multiple %130, 8 : i32
    %132 = arith.index_cast %131 : i32 to index
    %c0_47 = arith.constant 0 : index
    %133 = vector.load %arg8[%132, %c0_47] : memref<64x384xf32, #tpu.memory_space<vmem>>, vector<8x384xf32>
    %c0_48 = arith.constant 0 : index
    %c0_49 = arith.constant 0 : index
    %134 = vector.load %arg5[%c0_48, %c0_49] : memref<128x384xf32, #tpu.memory_space<vmem>>, vector<128x384xf32>
    %cst_50 = arith.constant dense<0.000000e+00> : vector<8x384xf32>
    %135 = tpu.matmul %129, %134, %cst_50 {dimension_numbers = #tpu.dot_dimension_numbers<[1], [0], [0], [1], [0, 0, 1, 1], [], []>} : vector<8x128xf32>, vector<128x384xf32>, vector<8x384xf32> -> vector<8x384xf32>
    %136 = vector.extract_strided_slice %133 {offsets = [0, 0], sizes = [8, 128], strides = [1, 1]} : vector<8x384xf32> to vector<8x128xf32>
    %137 = vector.extract_strided_slice %135 {offsets = [0, 0], sizes = [8, 128], strides = [1, 1]} : vector<8x384xf32> to vector<8x128xf32>
    %138 = arith.addf %136, %137 : vector<8x128xf32>
    %139 = arith.negf %138 : vector<8x128xf32>
    %140 = math.exp %139 : vector<8x128xf32>
    %cst_51 = arith.constant 1.000000e+00 : f32
    %141 = vector.broadcast %cst_51 : f32 to vector<8x128xf32>
    %142 = arith.addf %141, %140 : vector<8x128xf32>
    %143 = arith.divf %141, %142 : vector<8x128xf32>
    %144 = vector.extract_strided_slice %133 {offsets = [0, 128], sizes = [8, 128], strides = [1, 1]} : vector<8x384xf32> to vector<8x128xf32>
    %145 = vector.extract_strided_slice %135 {offsets = [0, 128], sizes = [8, 128], strides = [1, 1]} : vector<8x384xf32> to vector<8x128xf32>
    %146 = arith.addf %144, %145 : vector<8x128xf32>
    %147 = arith.negf %146 : vector<8x128xf32>
    %148 = math.exp %147 : vector<8x128xf32>
    %cst_52 = arith.constant 1.000000e+00 : f32
    %149 = vector.broadcast %cst_52 : f32 to vector<8x128xf32>
    %150 = arith.addf %149, %148 : vector<8x128xf32>
    %151 = arith.divf %149, %150 : vector<8x128xf32>
    %152 = vector.extract_strided_slice %133 {offsets = [0, 256], sizes = [8, 128], strides = [1, 1]} : vector<8x384xf32> to vector<8x128xf32>
    %153 = vector.extract_strided_slice %135 {offsets = [0, 256], sizes = [8, 128], strides = [1, 1]} : vector<8x384xf32> to vector<8x128xf32>
    %c0_53 = arith.constant 0 : index
    %c0_54 = arith.constant 0 : index
    %154 = vector.load %arg6[%c0_53, %c0_54] : memref<1x128xf32, #tpu.memory_space<vmem>>, vector<1x128xf32>
    %155 = vector.broadcast %154 : vector<1x128xf32> to vector<8x128xf32>
    %156 = arith.addf %153, %155 : vector<8x128xf32>
    %157 = arith.mulf %143, %156 : vector<8x128xf32>
    %158 = arith.addf %152, %157 : vector<8x128xf32>
    %159 = math.tanh %158 : vector<8x128xf32>
    %cst_55 = arith.constant 1.000000e+00 : f32
    %160 = vector.broadcast %cst_55 : f32 to vector<8x128xf32>
    %161 = arith.subf %160, %151 : vector<8x128xf32>
    %162 = arith.mulf %161, %159 : vector<8x128xf32>
    %163 = arith.mulf %151, %129 : vector<8x128xf32>
    %164 = arith.addf %162, %163 : vector<8x128xf32>
    %c8_i32_56 = arith.constant 8 : i32
    %165 = arith.muli %arg1, %c8_i32_56 : i32
    %166 = arith.addi %165, %c3_i32 : i32
    %c12_i32_57 = arith.constant 12 : i32
    %167 = arith.cmpi slt, %166, %c12_i32_57 : i32
    %168 = arith.select %167, %164, %129 : vector<8x128xf32>
    %c4_i32 = arith.constant 4 : i32
    %c8_i32_58 = arith.constant 8 : i32
    %169 = arith.muli %c4_i32, %c8_i32_58 : i32
    %170 = tpu.assume_multiple %169, 8 : i32
    %171 = arith.index_cast %170 : i32 to index
    %c0_59 = arith.constant 0 : index
    %172 = vector.load %arg8[%171, %c0_59] : memref<64x384xf32, #tpu.memory_space<vmem>>, vector<8x384xf32>
    %c0_60 = arith.constant 0 : index
    %c0_61 = arith.constant 0 : index
    %173 = vector.load %arg5[%c0_60, %c0_61] : memref<128x384xf32, #tpu.memory_space<vmem>>, vector<128x384xf32>
    %cst_62 = arith.constant dense<0.000000e+00> : vector<8x384xf32>
    %174 = tpu.matmul %168, %173, %cst_62 {dimension_numbers = #tpu.dot_dimension_numbers<[1], [0], [0], [1], [0, 0, 1, 1], [], []>} : vector<8x128xf32>, vector<128x384xf32>, vector<8x384xf32> -> vector<8x384xf32>
    %175 = vector.extract_strided_slice %172 {offsets = [0, 0], sizes = [8, 128], strides = [1, 1]} : vector<8x384xf32> to vector<8x128xf32>
    %176 = vector.extract_strided_slice %174 {offsets = [0, 0], sizes = [8, 128], strides = [1, 1]} : vector<8x384xf32> to vector<8x128xf32>
    %177 = arith.addf %175, %176 : vector<8x128xf32>
    %178 = arith.negf %177 : vector<8x128xf32>
    %179 = math.exp %178 : vector<8x128xf32>
    %cst_63 = arith.constant 1.000000e+00 : f32
    %180 = vector.broadcast %cst_63 : f32 to vector<8x128xf32>
    %181 = arith.addf %180, %179 : vector<8x128xf32>
    %182 = arith.divf %180, %181 : vector<8x128xf32>
    %183 = vector.extract_strided_slice %172 {offsets = [0, 128], sizes = [8, 128], strides = [1, 1]} : vector<8x384xf32> to vector<8x128xf32>
    %184 = vector.extract_strided_slice %174 {offsets = [0, 128], sizes = [8, 128], strides = [1, 1]} : vector<8x384xf32> to vector<8x128xf32>
    %185 = arith.addf %183, %184 : vector<8x128xf32>
    %186 = arith.negf %185 : vector<8x128xf32>
    %187 = math.exp %186 : vector<8x128xf32>
    %cst_64 = arith.constant 1.000000e+00 : f32
    %188 = vector.broadcast %cst_64 : f32 to vector<8x128xf32>
    %189 = arith.addf %188, %187 : vector<8x128xf32>
    %190 = arith.divf %188, %189 : vector<8x128xf32>
    %191 = vector.extract_strided_slice %172 {offsets = [0, 256], sizes = [8, 128], strides = [1, 1]} : vector<8x384xf32> to vector<8x128xf32>
    %192 = vector.extract_strided_slice %174 {offsets = [0, 256], sizes = [8, 128], strides = [1, 1]} : vector<8x384xf32> to vector<8x128xf32>
    %c0_65 = arith.constant 0 : index
    %c0_66 = arith.constant 0 : index
    %193 = vector.load %arg6[%c0_65, %c0_66] : memref<1x128xf32, #tpu.memory_space<vmem>>, vector<1x128xf32>
    %194 = vector.broadcast %193 : vector<1x128xf32> to vector<8x128xf32>
    %195 = arith.addf %192, %194 : vector<8x128xf32>
    %196 = arith.mulf %182, %195 : vector<8x128xf32>
    %197 = arith.addf %191, %196 : vector<8x128xf32>
    %198 = math.tanh %197 : vector<8x128xf32>
    %cst_67 = arith.constant 1.000000e+00 : f32
    %199 = vector.broadcast %cst_67 : f32 to vector<8x128xf32>
    %200 = arith.subf %199, %190 : vector<8x128xf32>
    %201 = arith.mulf %200, %198 : vector<8x128xf32>
    %202 = arith.mulf %190, %168 : vector<8x128xf32>
    %203 = arith.addf %201, %202 : vector<8x128xf32>
    %c8_i32_68 = arith.constant 8 : i32
    %204 = arith.muli %arg1, %c8_i32_68 : i32
    %205 = arith.addi %204, %c4_i32 : i32
    %c12_i32_69 = arith.constant 12 : i32
    %206 = arith.cmpi slt, %205, %c12_i32_69 : i32
    %207 = arith.select %206, %203, %168 : vector<8x128xf32>
    %c5_i32 = arith.constant 5 : i32
    %c8_i32_70 = arith.constant 8 : i32
    %208 = arith.muli %c5_i32, %c8_i32_70 : i32
    %209 = tpu.assume_multiple %208, 8 : i32
    %210 = arith.index_cast %209 : i32 to index
    %c0_71 = arith.constant 0 : index
    %211 = vector.load %arg8[%210, %c0_71] : memref<64x384xf32, #tpu.memory_space<vmem>>, vector<8x384xf32>
    %c0_72 = arith.constant 0 : index
    %c0_73 = arith.constant 0 : index
    %212 = vector.load %arg5[%c0_72, %c0_73] : memref<128x384xf32, #tpu.memory_space<vmem>>, vector<128x384xf32>
    %cst_74 = arith.constant dense<0.000000e+00> : vector<8x384xf32>
    %213 = tpu.matmul %207, %212, %cst_74 {dimension_numbers = #tpu.dot_dimension_numbers<[1], [0], [0], [1], [0, 0, 1, 1], [], []>} : vector<8x128xf32>, vector<128x384xf32>, vector<8x384xf32> -> vector<8x384xf32>
    %214 = vector.extract_strided_slice %211 {offsets = [0, 0], sizes = [8, 128], strides = [1, 1]} : vector<8x384xf32> to vector<8x128xf32>
    %215 = vector.extract_strided_slice %213 {offsets = [0, 0], sizes = [8, 128], strides = [1, 1]} : vector<8x384xf32> to vector<8x128xf32>
    %216 = arith.addf %214, %215 : vector<8x128xf32>
    %217 = arith.negf %216 : vector<8x128xf32>
    %218 = math.exp %217 : vector<8x128xf32>
    %cst_75 = arith.constant 1.000000e+00 : f32
    %219 = vector.broadcast %cst_75 : f32 to vector<8x128xf32>
    %220 = arith.addf %219, %218 : vector<8x128xf32>
    %221 = arith.divf %219, %220 : vector<8x128xf32>
    %222 = vector.extract_strided_slice %211 {offsets = [0, 128], sizes = [8, 128], strides = [1, 1]} : vector<8x384xf32> to vector<8x128xf32>
    %223 = vector.extract_strided_slice %213 {offsets = [0, 128], sizes = [8, 128], strides = [1, 1]} : vector<8x384xf32> to vector<8x128xf32>
    %224 = arith.addf %222, %223 : vector<8x128xf32>
    %225 = arith.negf %224 : vector<8x128xf32>
    %226 = math.exp %225 : vector<8x128xf32>
    %cst_76 = arith.constant 1.000000e+00 : f32
    %227 = vector.broadcast %cst_76 : f32 to vector<8x128xf32>
    %228 = arith.addf %227, %226 : vector<8x128xf32>
    %229 = arith.divf %227, %228 : vector<8x128xf32>
    %230 = vector.extract_strided_slice %211 {offsets = [0, 256], sizes = [8, 128], strides = [1, 1]} : vector<8x384xf32> to vector<8x128xf32>
    %231 = vector.extract_strided_slice %213 {offsets = [0, 256], sizes = [8, 128], strides = [1, 1]} : vector<8x384xf32> to vector<8x128xf32>
    %c0_77 = arith.constant 0 : index
    %c0_78 = arith.constant 0 : index
    %232 = vector.load %arg6[%c0_77, %c0_78] : memref<1x128xf32, #tpu.memory_space<vmem>>, vector<1x128xf32>
    %233 = vector.broadcast %232 : vector<1x128xf32> to vector<8x128xf32>
    %234 = arith.addf %231, %233 : vector<8x128xf32>
    %235 = arith.mulf %221, %234 : vector<8x128xf32>
    %236 = arith.addf %230, %235 : vector<8x128xf32>
    %237 = math.tanh %236 : vector<8x128xf32>
    %cst_79 = arith.constant 1.000000e+00 : f32
    %238 = vector.broadcast %cst_79 : f32 to vector<8x128xf32>
    %239 = arith.subf %238, %229 : vector<8x128xf32>
    %240 = arith.mulf %239, %237 : vector<8x128xf32>
    %241 = arith.mulf %229, %207 : vector<8x128xf32>
    %242 = arith.addf %240, %241 : vector<8x128xf32>
    %c8_i32_80 = arith.constant 8 : i32
    %243 = arith.muli %arg1, %c8_i32_80 : i32
    %244 = arith.addi %243, %c5_i32 : i32
    %c12_i32_81 = arith.constant 12 : i32
    %245 = arith.cmpi slt, %244, %c12_i32_81 : i32
    %246 = arith.select %245, %242, %207 : vector<8x128xf32>
    %c6_i32 = arith.constant 6 : i32
    %c8_i32_82 = arith.constant 8 : i32
    %247 = arith.muli %c6_i32, %c8_i32_82 : i32
    %248 = tpu.assume_multiple %247, 8 : i32
    %249 = arith.index_cast %248 : i32 to index
    %c0_83 = arith.constant 0 : index
    %250 = vector.load %arg8[%249, %c0_83] : memref<64x384xf32, #tpu.memory_space<vmem>>, vector<8x384xf32>
    %c0_84 = arith.constant 0 : index
    %c0_85 = arith.constant 0 : index
    %251 = vector.load %arg5[%c0_84, %c0_85] : memref<128x384xf32, #tpu.memory_space<vmem>>, vector<128x384xf32>
    %cst_86 = arith.constant dense<0.000000e+00> : vector<8x384xf32>
    %252 = tpu.matmul %246, %251, %cst_86 {dimension_numbers = #tpu.dot_dimension_numbers<[1], [0], [0], [1], [0, 0, 1, 1], [], []>} : vector<8x128xf32>, vector<128x384xf32>, vector<8x384xf32> -> vector<8x384xf32>
    %253 = vector.extract_strided_slice %250 {offsets = [0, 0], sizes = [8, 128], strides = [1, 1]} : vector<8x384xf32> to vector<8x128xf32>
    %254 = vector.extract_strided_slice %252 {offsets = [0, 0], sizes = [8, 128], strides = [1, 1]} : vector<8x384xf32> to vector<8x128xf32>
    %255 = arith.addf %253, %254 : vector<8x128xf32>
    %256 = arith.negf %255 : vector<8x128xf32>
    %257 = math.exp %256 : vector<8x128xf32>
    %cst_87 = arith.constant 1.000000e+00 : f32
    %258 = vector.broadcast %cst_87 : f32 to vector<8x128xf32>
    %259 = arith.addf %258, %257 : vector<8x128xf32>
    %260 = arith.divf %258, %259 : vector<8x128xf32>
    %261 = vector.extract_strided_slice %250 {offsets = [0, 128], sizes = [8, 128], strides = [1, 1]} : vector<8x384xf32> to vector<8x128xf32>
    %262 = vector.extract_strided_slice %252 {offsets = [0, 128], sizes = [8, 128], strides = [1, 1]} : vector<8x384xf32> to vector<8x128xf32>
    %263 = arith.addf %261, %262 : vector<8x128xf32>
    %264 = arith.negf %263 : vector<8x128xf32>
    %265 = math.exp %264 : vector<8x128xf32>
    %cst_88 = arith.constant 1.000000e+00 : f32
    %266 = vector.broadcast %cst_88 : f32 to vector<8x128xf32>
    %267 = arith.addf %266, %265 : vector<8x128xf32>
    %268 = arith.divf %266, %267 : vector<8x128xf32>
    %269 = vector.extract_strided_slice %250 {offsets = [0, 256], sizes = [8, 128], strides = [1, 1]} : vector<8x384xf32> to vector<8x128xf32>
    %270 = vector.extract_strided_slice %252 {offsets = [0, 256], sizes = [8, 128], strides = [1, 1]} : vector<8x384xf32> to vector<8x128xf32>
    %c0_89 = arith.constant 0 : index
    %c0_90 = arith.constant 0 : index
    %271 = vector.load %arg6[%c0_89, %c0_90] : memref<1x128xf32, #tpu.memory_space<vmem>>, vector<1x128xf32>
    %272 = vector.broadcast %271 : vector<1x128xf32> to vector<8x128xf32>
    %273 = arith.addf %270, %272 : vector<8x128xf32>
    %274 = arith.mulf %260, %273 : vector<8x128xf32>
    %275 = arith.addf %269, %274 : vector<8x128xf32>
    %276 = math.tanh %275 : vector<8x128xf32>
    %cst_91 = arith.constant 1.000000e+00 : f32
    %277 = vector.broadcast %cst_91 : f32 to vector<8x128xf32>
    %278 = arith.subf %277, %268 : vector<8x128xf32>
    %279 = arith.mulf %278, %276 : vector<8x128xf32>
    %280 = arith.mulf %268, %246 : vector<8x128xf32>
    %281 = arith.addf %279, %280 : vector<8x128xf32>
    %c8_i32_92 = arith.constant 8 : i32
    %282 = arith.muli %arg1, %c8_i32_92 : i32
    %283 = arith.addi %282, %c6_i32 : i32
    %c12_i32_93 = arith.constant 12 : i32
    %284 = arith.cmpi slt, %283, %c12_i32_93 : i32
    %285 = arith.select %284, %281, %246 : vector<8x128xf32>
    %c7_i32 = arith.constant 7 : i32
    %c8_i32_94 = arith.constant 8 : i32
    %286 = arith.muli %c7_i32, %c8_i32_94 : i32
    %287 = tpu.assume_multiple %286, 8 : i32
    %288 = arith.index_cast %287 : i32 to index
    %c0_95 = arith.constant 0 : index
    %289 = vector.load %arg8[%288, %c0_95] : memref<64x384xf32, #tpu.memory_space<vmem>>, vector<8x384xf32>
    %c0_96 = arith.constant 0 : index
    %c0_97 = arith.constant 0 : index
    %290 = vector.load %arg5[%c0_96, %c0_97] : memref<128x384xf32, #tpu.memory_space<vmem>>, vector<128x384xf32>
    %cst_98 = arith.constant dense<0.000000e+00> : vector<8x384xf32>
    %291 = tpu.matmul %285, %290, %cst_98 {dimension_numbers = #tpu.dot_dimension_numbers<[1], [0], [0], [1], [0, 0, 1, 1], [], []>} : vector<8x128xf32>, vector<128x384xf32>, vector<8x384xf32> -> vector<8x384xf32>
    %292 = vector.extract_strided_slice %289 {offsets = [0, 0], sizes = [8, 128], strides = [1, 1]} : vector<8x384xf32> to vector<8x128xf32>
    %293 = vector.extract_strided_slice %291 {offsets = [0, 0], sizes = [8, 128], strides = [1, 1]} : vector<8x384xf32> to vector<8x128xf32>
    %294 = arith.addf %292, %293 : vector<8x128xf32>
    %295 = arith.negf %294 : vector<8x128xf32>
    %296 = math.exp %295 : vector<8x128xf32>
    %cst_99 = arith.constant 1.000000e+00 : f32
    %297 = vector.broadcast %cst_99 : f32 to vector<8x128xf32>
    %298 = arith.addf %297, %296 : vector<8x128xf32>
    %299 = arith.divf %297, %298 : vector<8x128xf32>
    %300 = vector.extract_strided_slice %289 {offsets = [0, 128], sizes = [8, 128], strides = [1, 1]} : vector<8x384xf32> to vector<8x128xf32>
    %301 = vector.extract_strided_slice %291 {offsets = [0, 128], sizes = [8, 128], strides = [1, 1]} : vector<8x384xf32> to vector<8x128xf32>
    %302 = arith.addf %300, %301 : vector<8x128xf32>
    %303 = arith.negf %302 : vector<8x128xf32>
    %304 = math.exp %303 : vector<8x128xf32>
    %cst_100 = arith.constant 1.000000e+00 : f32
    %305 = vector.broadcast %cst_100 : f32 to vector<8x128xf32>
    %306 = arith.addf %305, %304 : vector<8x128xf32>
    %307 = arith.divf %305, %306 : vector<8x128xf32>
    %308 = vector.extract_strided_slice %289 {offsets = [0, 256], sizes = [8, 128], strides = [1, 1]} : vector<8x384xf32> to vector<8x128xf32>
    %309 = vector.extract_strided_slice %291 {offsets = [0, 256], sizes = [8, 128], strides = [1, 1]} : vector<8x384xf32> to vector<8x128xf32>
    %c0_101 = arith.constant 0 : index
    %c0_102 = arith.constant 0 : index
    %310 = vector.load %arg6[%c0_101, %c0_102] : memref<1x128xf32, #tpu.memory_space<vmem>>, vector<1x128xf32>
    %311 = vector.broadcast %310 : vector<1x128xf32> to vector<8x128xf32>
    %312 = arith.addf %309, %311 : vector<8x128xf32>
    %313 = arith.mulf %299, %312 : vector<8x128xf32>
    %314 = arith.addf %308, %313 : vector<8x128xf32>
    %315 = math.tanh %314 : vector<8x128xf32>
    %cst_103 = arith.constant 1.000000e+00 : f32
    %316 = vector.broadcast %cst_103 : f32 to vector<8x128xf32>
    %317 = arith.subf %316, %307 : vector<8x128xf32>
    %318 = arith.mulf %317, %315 : vector<8x128xf32>
    %319 = arith.mulf %307, %285 : vector<8x128xf32>
    %320 = arith.addf %318, %319 : vector<8x128xf32>
    %c8_i32_104 = arith.constant 8 : i32
    %321 = arith.muli %arg1, %c8_i32_104 : i32
    %322 = arith.addi %321, %c7_i32 : i32
    %c12_i32_105 = arith.constant 12 : i32
    %323 = arith.cmpi slt, %322, %c12_i32_105 : i32
    %324 = arith.select %323, %320, %285 : vector<8x128xf32>
    %c8_i32_106 = arith.constant 8 : i32
    %c0_107 = arith.constant 0 : index
    %c0_108 = arith.constant 0 : index
    %325 = vector.load %arg7[%c0_107, %c0_108] : memref<8x128xf32, #tpu.memory_space<vmem>>, vector<8x128xf32>
    tpu.vector_store %arg7[%c0_107, %c0_108], %324 {strides = array<i32>} : memref<8x128xf32, #tpu.memory_space<vmem>>, vector<8x128xf32>,
    return
  }
  func.func @transform_0(%arg0: i32, %arg1: i32) -> (i32, i32, i32) {
    %c0_i32 = arith.constant 0 : i32
    %c0_i32_0 = arith.constant 0 : i32
    return %arg1, %arg0, %c0_i32 : i32, i32, i32
  }
  func.func @transform_1(%arg0: i32, %arg1: i32) -> (i32, i32) {
    %c0_i32 = arith.constant 0 : i32
    %c0_i32_0 = arith.constant 0 : i32
    %c0_i32_1 = arith.constant 0 : i32
    return %c0_i32, %c0_i32_0 : i32, i32
  }
  func.func @transform_2(%arg0: i32, %arg1: i32) -> (i32, i32) {
    %c0_i32 = arith.constant 0 : i32
    %c0_i32_0 = arith.constant 0 : i32
    %c0_i32_1 = arith.constant 0 : i32
    return %c0_i32, %c0_i32_0 : i32, i32
  }
  func.func @transform_3(%arg0: i32, %arg1: i32) -> (i32, i32) {
    %c0_i32 = arith.constant 0 : i32
    %c0_i32_0 = arith.constant 0 : i32
    %c0_i32_1 = arith.constant 0 : i32
    return %c0_i32, %c0_i32_0 : i32, i32
  }
  func.func @transform_4(%arg0: i32, %arg1: i32) -> (i32, i32) {
    %c0_i32 = arith.constant 0 : i32
    %c0_i32_0 = arith.constant 0 : i32
    %c0_i32_1 = arith.constant 0 : i32
    return %c0_i32, %c0_i32_0 : i32, i32
  }
  func.func @transform_5(%arg0: i32, %arg1: i32) -> (i32, i32) {
    %c0_i32 = arith.constant 0 : i32
    %c0_i32_0 = arith.constant 0 : i32
    return %arg0, %c0_i32 : i32, i32
  }
}

</mosaic_0001>

<llo_original>
// kernel: sequence_encoder_forward.1
$region0: #{sequence_encoder_forward.1}
  #allocation0 [shape = 'u32[]', space=smem, size = 0x4, offset = 0x4, fixed_abs, tag = 'smem constant byte address 0x4 - core index']
  #allocation1 [shape = 'u32[72,128]{1,0:T(1,128)}', space=vmem, size = 0x9000, scoped, tag = 'internal scratch']
  #allocation2 [shape = 'f32[64,384]{1,0:T(8,128)}', space=vmem, size = 0x18000, scoped, tag = 'scratch operand']
  %s0 = inlined_call_operand.vmem [shape: f32[16,8,128], index: 0, kind: input, shape index: {}]
  %s1 = inlined_call_operand.vmem [shape: bf16[128,384], index: 1, kind: input, shape index: {}]
  %s2 = inlined_call_operand.vmem [shape: f32[1,384], index: 2, kind: input, shape index: {}]
  %s3 = inlined_call_operand.hbm [shape: f32[128,384], index: 3, kind: input, shape index: {}]
  %s4 = inlined_call_operand.vmem [shape: f32[1,128], index: 4, kind: input, shape index: {}]
  %s5 = inlined_call_operand.vmem [shape: f32[8,128], index: 5, kind: output, shape index: {}]
  %s6 = sld [smem:[#allocation0]]
  $region61: #{sequence_encoder_forward.1} parent=0
    _
  %s8 = ssub.s32 1, %s6
  %s9 = scalar_select 0, %s8, %s6
  $region1: #{sequence_encoder_forward.1} parent=0
    #allocation3 [shape = 'u8[196608]{0}', space=vmem, size = 0x30000, scoped, tag = 'input window, operand 3, single buffered']
    #allocation4 [shape = 's32[2]{0}', space=sflag, size = 0x8, scoped, tag = 'scoped memory for sequence_encoder_forward.1']
    %10 = vsyncpa [#allocation4], 0
    loop: start=0, step=1, limit=4
    $region2: #{sequence_encoder_forward.1} parent=1 // loop_pre_header
      _
    $region3: #{sequence_encoder_forward.1} parent=1 // loop_header
      %s12 = sphi 0, %s16
      %p13 = scmp.ge.s32.totalorder %s12, 4
      %s19 = sphi 0, %s31
      %s20 = sphi 0, %s27
      %s21 = sphi 0, %s19
      %s22 = sphi 0, %s20
      %s23 = sphi 0, %s21
      %s24 = sphi 0, %s22
      %s36 = sphi 0, %s38
      %s39 = sphi 0, %s36
      %s40 = sphi 0, %s39
      %s56 = sphi 0, %s40
      %s60 = sphi 0, %s60
      %s62 = sphi 0, %s60
      %s63 = sphi 0, %s62
      %s77 = sphi 0, %s63
      %s81 = sphi 0, %s81
      %s83 = sphi 0, %s81
      %s84 = sphi 0, %s83
      %s98 = sphi 0, %s84
      %s102 = sphi 0, %s102
      %s104 = sphi 0, %s102
      %s105 = sphi 0, %s104
      %s119 = sphi 0, %s105
      %s123 = sphi 0, %s123
      %s125 = sphi 0, %s123
      %s126 = sphi 0, %s125
      %s140 = sphi 0, %s126
      %s146 = sphi 0, %s148
      %s149 = sphi 0, %s146
      %s150 = sphi 0, %s149
      %s166 = sphi 0, %s150
    $region4: #{sequence_encoder_forward.1} parent=1 // loop_header_branch
      %15 = sbr.rel (%p13) target = $region8
    $region5: #{sequence_encoder_forward.1} parent=1 // loop_body
      %s17 = ssub.s32 %s12, 1
      %s18 = ssub.s32 %s12, 2
      %s25 = sadd.s32 1, %s20
      %p26 = scmp.ge.s32.totalorder %s25, 2
      %s27 = scalar_select %p26, 0, %s25
      %s28 = sadd.s32 1, %s19
      %s29 = scalar_select %p26, %s28, %s19
      %p30 = scmp.ge.s32.totalorder %s29, 1
      %s31 = scalar_select %p30, 0, %s29
      %s32 = ssub.s32 %s20, %s27
      %s33 = ssub.s32 %s19, %s31
      %s34 = sor.u32 %s32, %s33
      %p35 = scmp.eq.s32.totalorder %s34, 0
      %s37 = sadd.s32 %s36, 1
      %s38 = scalar_select %p35, %s36, %s37
      %p41 = pneg %p35
      %p42 = scmp.eq.s32.totalorder %s12, 1
      %p43 = por %p41, %p42
      %p44 = scmp.ne.s32.totalorder %s36, %s39
      %p45 = scmp.eq.s32.totalorder %s12, 0
      %p46 = por %p44, %p45
      %p47 = scmp.ne.s32.totalorder %s36, %s39
      %p48 = scmp.eq.s32.totalorder %s17, 1
      %p49 = por %p47, %p48
      %p50 = scmp.ne.s32.totalorder %s39, %s40
      %p51 = scmp.eq.s32.totalorder %s17, 0
      %p52 = por %p50, %p51
      %p53 = scmp.ne.s32.totalorder %s39, %s40
      %p54 = scmp.eq.s32.totalorder %s18, 1
      %p55 = por %p53, %p54
      %p57 = scmp.ne.s32.totalorder %s40, %s56
      %p58 = scmp.eq.s32.totalorder %s18, 0
      %p59 = por %p57, %p58
      %s61 = sadd.s32 %s60, 1
      %p64 = scmp.eq.s32.totalorder %s12, 1
      %p65 = scmp.ne.s32.totalorder %s60, %s62
      %p66 = scmp.eq.s32.totalorder %s12, 0
      %p67 = por %p65, %p66
      %p68 = scmp.ne.s32.totalorder %s60, %s62
      %p69 = scmp.eq.s32.totalorder %s17, 1
      %p70 = por %p68, %p69
      %p71 = scmp.ne.s32.totalorder %s62, %s63
      %p72 = scmp.eq.s32.totalorder %s17, 0
      %p73 = por %p71, %p72
      %p74 = scmp.ne.s32.totalorder %s62, %s63
      %p75 = scmp.eq.s32.totalorder %s18, 1
      %p76 = por %p74, %p75
      %p78 = scmp.ne.s32.totalorder %s63, %s77
      %p79 = scmp.eq.s32.totalorder %s18, 0
      %p80 = por %p78, %p79
      %s82 = sadd.s32 %s81, 1
      %p85 = scmp.eq.s32.totalorder %s12, 1
      %p86 = scmp.ne.s32.totalorder %s81, %s83
      %p87 = scmp.eq.s32.totalorder %s12, 0
      %p88 = por %p86, %p87
      %p89 = scmp.ne.s32.totalorder %s81, %s83
      %p90 = scmp.eq.s32.totalorder %s17, 1
      %p91 = por %p89, %p90
      %p92 = scmp.ne.s32.totalorder %s83, %s84
      %p93 = scmp.eq.s32.totalorder %s17, 0
      %p94 = por %p92, %p93
      %p95 = scmp.ne.s32.totalorder %s83, %s84
      %p96 = scmp.eq.s32.totalorder %s18, 1
      %p97 = por %p95, %p96
      %p99 = scmp.ne.s32.totalorder %s84, %s98
      %p100 = scmp.eq.s32.totalorder %s18, 0
      %p101 = por %p99, %p100
      %s103 = sadd.s32 %s102, 1
      %p106 = scmp.eq.s32.totalorder %s12, 1
      %p107 = scmp.ne.s32.totalorder %s102, %s104
      %p108 = scmp.eq.s32.totalorder %s12, 0
      %p109 = por %p107, %p108
      %p110 = scmp.ne.s32.totalorder %s102, %s104
      %p111 = scmp.eq.s32.totalorder %s17, 1
      %p112 = por %p110, %p111
      %p113 = scmp.ne.s32.totalorder %s104, %s105
      %p114 = scmp.eq.s32.totalorder %s17, 0
      %p115 = por %p113, %p114
      %p116 = scmp.ne.s32.totalorder %s104, %s105
      %p117 = scmp.eq.s32.totalorder %s18, 1
      %p118 = por %p116, %p117
      %p120 = scmp.ne.s32.totalorder %s105, %s119
      %p121 = scmp.eq.s32.totalorder %s18, 0
      %p122 = por %p120, %p121
      %s124 = sadd.s32 %s123, 1
      %p127 = scmp.eq.s32.totalorder %s12, 1
      %p128 = scmp.ne.s32.totalorder %s123, %s125
      %p129 = scmp.eq.s32.totalorder %s12, 0
      %p130 = por %p128, %p129
      %p131 = scmp.ne.s32.totalorder %s123, %s125
      %p132 = scmp.eq.s32.totalorder %s17, 1
      %p133 = por %p131, %p132
      %p134 = scmp.ne.s32.totalorder %s125, %s126
      %p135 = scmp.eq.s32.totalorder %s17, 0
      %p136 = por %p134, %p135
      %p137 = scmp.ne.s32.totalorder %s125, %s126
      %p138 = scmp.eq.s32.totalorder %s18, 1
      %p139 = por %p137, %p138
      %p141 = scmp.ne.s32.totalorder %s126, %s140
      %p142 = scmp.eq.s32.totalorder %s18, 0
      %p143 = por %p141, %p142
      %s144 = ssub.s32 %s19, %s31
      %p145 = scmp.eq.s32.totalorder %s144, 0
      %s147 = sadd.s32 %s146, 1
      %s148 = scalar_select %p145, %s146, %s147
      %p151 = pneg %p145
      %p152 = scmp.eq.s32.totalorder %s12, 1
      %p153 = por %p151, %p152
      %p154 = scmp.ne.s32.totalorder %s146, %s149
      %p155 = scmp.eq.s32.totalorder %s12, 0
      %p156 = por %p154, %p155
      %p157 = scmp.ne.s32.totalorder %s146, %s149
      %p158 = scmp.eq.s32.totalorder %s17, 1
      %p159 = por %p157, %p158
      %p160 = scmp.ne.s32.totalorder %s149, %s150
      %p161 = scmp.eq.s32.totalorder %s17, 0
      %p162 = por %p160, %p161
      %p163 = scmp.ne.s32.totalorder %s149, %s150
      %p164 = scmp.eq.s32.totalorder %s18, 1
      %p165 = por %p163, %p164
      %p167 = scmp.ne.s32.totalorder %s150, %s166
      %p168 = scmp.eq.s32.totalorder %s18, 0
      %p169 = por %p167, %p168
      %p170 = scmp.le.s32.totalorder 1, %s12
      %p171 = scmp.lt.s32.totalorder %s12, 3
      %p172 = pnand %p170, %p171
      %p173 = pneg %p172
      // Predicated region
      $region9: #{sequence_encoder_forward.1} parent=5 // pred_check
        _
      $region10: #{sequence_encoder_forward.1} parent=5 // pred_check_branch
        %175 = sbr.rel (%p172) target = $region12
      $region11: #{sequence_encoder_forward.1} parent=5 // pred_region
        %s176 = ssub.s32 %s12, 1
        // Predicated region
        $region13: #{sequence_encoder_forward.1} parent=11 // pred_check
          %p177 = pneg %p73
        $region14: #{sequence_encoder_forward.1} parent=11 // pred_check_branch
          %179 = sbr.rel (%p177) target = $region16
        $region15: #{sequence_encoder_forward.1} parent=11 // pred_region
          _
        $region16: #{sequence_encoder_forward.1} parent=11 // pred_fallthru
          _
        // Predicated region
        $region17: #{sequence_encoder_forward.1} parent=11 // pred_check
          %p180 = pneg %p94
        $region18: #{sequence_encoder_forward.1} parent=11 // pred_check_branch
          %182 = sbr.rel (%p180) target = $region20
        $region19: #{sequence_encoder_forward.1} parent=11 // pred_region
          _
        $region20: #{sequence_encoder_forward.1} parent=11 // pred_fallthru
          _
        // Predicated region
        $region21: #{sequence_encoder_forward.1} parent=11 // pred_check
          %p183 = pneg %p115
        $region22: #{sequence_encoder_forward.1} parent=11 // pred_check_branch
          %185 = sbr.rel (%p183) target = $region24
        $region23: #{sequence_encoder_forward.1} parent=11 // pred_region
          %187 = vsyncadd [#allocation4], 0
          %s188 = sshll.u32 %s3, 4
          %s189 = int_to_ptr.hbm [resolvable:$true] %s188
          %s190 = sshll.u32 [#allocation3], 4
          %s191 = int_to_ptr.vmem [resolvable:$true] %s190
          %196 = dma.hbm_to_vmem [thread:$0]  %s189, 6144, %s191, [#allocation4], 384, 384, 24
        $region24: #{sequence_encoder_forward.1} parent=11 // pred_fallthru
          _
        // Predicated region
        $region25: #{sequence_encoder_forward.1} parent=11 // pred_check
          %p197 = pneg %p136
        $region26: #{sequence_encoder_forward.1} parent=11 // pred_check_branch
          %199 = sbr.rel (%p197) target = $region28
        $region27: #{sequence_encoder_forward.1} parent=11 // pred_region
          _
        $region28: #{sequence_encoder_forward.1} parent=11 // pred_fallthru
          _
      $region12: #{sequence_encoder_forward.1} parent=5 // pred_fallthru
        _
      %p200 = scmp.lt.s32.totalorder %s12, 2
      // Predicated region
      $region29: #{sequence_encoder_forward.1} parent=5 // pred_check
        %p201 = pneg %p200
      $region30: #{sequence_encoder_forward.1} parent=5 // pred_check_branch
        %203 = sbr.rel (%p201) target = $region32
      $region31: #{sequence_encoder_forward.1} parent=5 // pred_region
        // Predicated region
        $region33: #{sequence_encoder_forward.1} parent=31 // pred_check
          %p204 = pneg %p46
        $region34: #{sequence_encoder_forward.1} parent=31 // pred_check_branch
          %206 = sbr.rel (%p204) target = $region36
        $region35: #{sequence_encoder_forward.1} parent=31 // pred_region
          %s207 = smul.u32 8, %s20
          %p208 = scmp.lt.s32.totalorder %s207, 15
          %s209 = scalar_select %p208, %s207, 15
          %p210 = scmp.lt.s32.totalorder %s19, 0
          %s211 = scalar_select %p210, %s19, 0
          %s212 = sadd.s32 %s211, %s209
          %s213 = smul.addr %s212, 8
          %s214 = scalar_lea.vmem %s0, %s213
          %s215 = smul.u32 8, %s20
        $region36: #{sequence_encoder_forward.1} parent=31 // pred_fallthru
          _
      $region32: #{sequence_encoder_forward.1} parent=5 // pred_fallthru
        _
      %p216 = scmp.le.s32.totalorder 1, %s12
      %p217 = scmp.lt.s32.totalorder %s12, 3
      %p218 = pnand %p216, %p217
      %p219 = pneg %p218
      // Predicated region
      $region37: #{sequence_encoder_forward.1} parent=5 // pred_check
        _
      $region38: #{sequence_encoder_forward.1} parent=5 // pred_check_branch
        %221 = sbr.rel (%p218) target = $region40
      $region39: #{sequence_encoder_forward.1} parent=5 // pred_region
        %s222 = ssub.s32 %s12, 1
        // Predicated region
        $region41: #{sequence_encoder_forward.1} parent=39 // pred_check
          %p223 = pneg %p115
        $region42: #{sequence_encoder_forward.1} parent=39 // pred_check_branch
          %225 = sbr.rel (%p223) target = $region44
        $region43: #{sequence_encoder_forward.1} parent=39 // pred_region
          %227 = dma.done [#allocation4], 6144
        $region44: #{sequence_encoder_forward.1} parent=39 // pred_fallthru
          _
        %s228 = smul.u32 8, %s22
        %p229 = scmp.lt.s32.totalorder %s228, 15
        %s230 = scalar_select %p229, %s228, 15
        %p231 = scmp.lt.s32.totalorder %s21, 0
        %s232 = scalar_select %p231, %s21, 0
        %s233 = sadd.s32 %s232, %s230
        %s234 = smul.addr %s233, 8
        %s235 = scalar_lea.vmem %s0, %s234
        %p236 = pneg %p52
        %p237 = pneg %p49
        %p238 = pneg %p73
        %p239 = pneg %p70
        %p240 = pneg %p94
        %p241 = pneg %p91
        %p242 = pneg %p115
        %p243 = pneg %p112
        %p244 = pneg %p136
        %p245 = pneg %p133
        %p246 = pneg %p162
        %p247 = pneg %p159
        %p248 = scmp.lt.s32.totalorder %s21, 0
        %s249 = scalar_select %p248, %s21, 0
        %s250 = smul.addr %s249, 8
        %s251 = scalar_lea.vmem %s5, %s250
        %s252 = smul.u32 8, %s22
        %p253 = scmp.lt.s32.totalorder %s252, 15
        %s254 = scalar_select %p253, %s252, 15
        %p255 = scmp.lt.s32.totalorder %s21, 0
        %s256 = scalar_select %p255, %s21, 0
        %s257 = sadd.s32 %s256, %s254
        %s258 = smul.addr %s257, 8
        %s259 = scalar_lea.vmem %s0, %s258
        %s260 = smul.u32 8, %s22
        %p261 = scmp.lt.s32.totalorder %s21, 0
        %s262 = scalar_select %p261, %s21, 0
        %s263 = smul.addr %s262, 8
        %s264 = scalar_lea.vmem %s5, %s263
        %p265 = scmp.eq.s32.totalorder %s22, 0
        // Predicated region
        $region45: #{sequence_encoder_forward.1} parent=39 // pred_check
          %p266 = pneg %p265
        $region46: #{sequence_encoder_forward.1} parent=39 // pred_check_branch
          %268 = sbr.rel (%p266) target = $region48
        $region47: #{sequence_encoder_forward.1} parent=39 // pred_region
          %269 = vst [vmem:[%s264] sm:$0xff] 0.0
        $region48: #{sequence_encoder_forward.1} parent=39 // pred_fallthru
          _
        %v270 = vld [vmem:[%s259] sm:$0xff]
        %v271 = vld [vmem:[%s259 + $0x8] sm:$0xff]
        %v272 = vld [vmem:[%s259 + $0x10] sm:$0xff]
        %v273 = vld [vmem:[%s259 + $0x18] sm:$0xff]
        %v274 = vld [vmem:[%s259 + $0x20] sm:$0xff]
        %v275 = vld [vmem:[%s259 + $0x28] sm:$0xff]
        %v276 = vld [vmem:[%s259 + $0x30] sm:$0xff]
        %v277 = vld [vmem:[%s259 + $0x38] sm:$0xff]
        %v278 = vpack.c.bf16 %v271, %v270
        %v279 = vpack.c.bf16 %v273, %v272
        %v280 = vpack.c.bf16 %v275, %v274
        %v281 = vpack.c.bf16 %v277, %v276
        %v282 = vld [vmem:[%s1] sm:$0xff]
        %v283 = vld [vmem:[%s1 + $0x8] sm:$0xf]
        %v284 = vld [vmem:[%s1 + $0xc] sm:$0xff]
        %v285 = vld [vmem:[%s1 + $0x14] sm:$0xf]
        %v286 = vld [vmem:[%s1 + $0x18] sm:$0xff]
        %v287 = vld [vmem:[%s1 + $0x20] sm:$0xf]
        %v288 = vld [vmem:[%s1 + $0x24] sm:$0xff]
        %v289 = vld [vmem:[%s1 + $0x2c] sm:$0xf]
        %v290 = vld [vmem:[%s1 + $0x30] sm:$0xff]
        %v291 = vld [vmem:[%s1 + $0x38] sm:$0xf]
        %v292 = vld [vmem:[%s1 + $0x3c] sm:$0xff]
        %v293 = vld [vmem:[%s1 + $0x44] sm:$0xf]
        %v294 = vld [vmem:[%s1 + $0x48] sm:$0xff]
        %v295 = vld [vmem:[%s1 + $0x50] sm:$0xf]
        %v296 = vld [vmem:[%s1 + $0x54] sm:$0xff]
        %v297 = vld [vmem:[%s1 + $0x5c] sm:$0xf]
        %v298 = vld [vmem:[%s1 + $0x60] sm:$0xff]
        %v299 = vld [vmem:[%s1 + $0x68] sm:$0xf]
        %v300 = vld [vmem:[%s1 + $0x6c] sm:$0xff]
        %v301 = vld [vmem:[%s1 + $0x74] sm:$0xf]
        %v302 = vld [vmem:[%s1 + $0x78] sm:$0xff]
        %v303 = vld [vmem:[%s1 + $0x80] sm:$0xf]
        %v304 = vld [vmem:[%s1 + $0x84] sm:$0xff]
        %v305 = vld [vmem:[%s1 + $0x8c] sm:$0xf]
        %v306 = vld [vmem:[%s1 + $0x90] sm:$0xff]
        %v307 = vld [vmem:[%s1 + $0x98] sm:$0xf]
        %v308 = vld [vmem:[%s1 + $0x9c] sm:$0xff]
        %v309 = vld [vmem:[%s1 + $0xa4] sm:$0xf]
        %v310 = vld [vmem:[%s1 + $0xa8] sm:$0xff]
        %v311 = vld [vmem:[%s1 + $0xb0] sm:$0xf]
        %v312 = vld [vmem:[%s1 + $0xb4] sm:$0xff]
        %v313 = vld [vmem:[%s1 + $0xbc] sm:$0xf]
        %v314 = vld [vmem:[%s2] sm:$0x7]
        %v316 = vperm.slane %v314, 0
        %v317 = vperm.slane %v314, 1
        %v318 = vperm.slane %v314, 2
        %v354 = vunpack.c.l.b16 %v282
        %v355 = vunpack.c.h.b16 %v282
        %v356 = vunpack.c.l.b16 %v283
        %v357 = vunpack.c.l.b16 %v284
        %v358 = vunpack.c.h.b16 %v284
        %v359 = vunpack.c.l.b16 %v285
        %v360 = vunpack.c.l.b16 %v286
        %v361 = vunpack.c.h.b16 %v286
        %v362 = vunpack.c.l.b16 %v287
        %v363 = vunpack.c.l.b16 %v288
        %v364 = vunpack.c.h.b16 %v288
        %v365 = vunpack.c.l.b16 %v289
        %v366 = vunpack.c.l.b16 %v290
        %v367 = vunpack.c.h.b16 %v290
        %v368 = vunpack.c.l.b16 %v291
        %v369 = vunpack.c.l.b16 %v292
        %v370 = vunpack.c.h.b16 %v292
        %v371 = vunpack.c.l.b16 %v293
        %v372 = vunpack.c.l.b16 %v294
        %v373 = vunpack.c.h.b16 %v294
        %v374 = vunpack.c.l.b16 %v295
        %v375 = vunpack.c.l.b16 %v296
        %v376 = vunpack.c.h.b16 %v296
        %v377 = vunpack.c.l.b16 %v297
        %v378 = vunpack.c.l.b16 %v298
        %v379 = vunpack.c.h.b16 %v298
        %v380 = vunpack.c.l.b16 %v299
        %v381 = vunpack.c.l.b16 %v300
        %v382 = vunpack.c.h.b16 %v300
        %v383 = vunpack.c.l.b16 %v301
        %v384 = vunpack.c.l.b16 %v302
        %v385 = vunpack.c.h.b16 %v302
        %v386 = vunpack.c.l.b16 %v303
        %v387 = vunpack.c.l.b16 %v304
        %v388 = vunpack.c.h.b16 %v304
        %v389 = vunpack.c.l.b16 %v305
        %v390 = vunpack.c.l.b16 %v306
        %v391 = vunpack.c.h.b16 %v306
        %v392 = vunpack.c.l.b16 %v307
        %v393 = vunpack.c.l.b16 %v308
        %v394 = vunpack.c.h.b16 %v308
        %v395 = vunpack.c.l.b16 %v309
        %v396 = vunpack.c.l.b16 %v310
        %v397 = vunpack.c.h.b16 %v310
        %v398 = vunpack.c.l.b16 %v311
        %v399 = vunpack.c.l.b16 %v312
        %v400 = vunpack.c.h.b16 %v312
        %v401 = vunpack.c.l.b16 %v313
        %v402 = vpack.c.b16 %v357, %v354
        %v403 = vpack.c.b16 %v358, %v355
        %v404 = vpack.c.b16 %v359, %v356
        %v405 = vpack.c.b16 %v363, %v360
        %v406 = vpack.c.b16 %v364, %v361
        %v407 = vpack.c.b16 %v365, %v362
        %v408 = vpack.c.b16 %v369, %v366
        %v409 = vpack.c.b16 %v370, %v367
        %v410 = vpack.c.b16 %v371, %v368
        %v411 = vpack.c.b16 %v375, %v372
        %v412 = vpack.c.b16 %v376, %v373
        %v413 = vpack.c.b16 %v377, %v374
        %v414 = vpack.c.b16 %v381, %v378
        %v415 = vpack.c.b16 %v382, %v379
        %v416 = vpack.c.b16 %v383, %v380
        %v417 = vpack.c.b16 %v387, %v384
        %v418 = vpack.c.b16 %v388, %v385
        %v419 = vpack.c.b16 %v389, %v386
        %v420 = vpack.c.b16 %v393, %v390
        %v421 = vpack.c.b16 %v394, %v391
        %v422 = vpack.c.b16 %v395, %v392
        %v423 = vpack.c.b16 %v399, %v396
        %v424 = vpack.c.b16 %v400, %v397
        %v425 = vpack.c.b16 %v401, %v398
        %450 = vmatpush.bf16.msra.mxu0 %v423
        %451 = vmatpush.bf16.msra.mxu0 %v420
        %452 = vmatpush.bf16.msra.mxu0 %v417
        %453 = vmatpush.bf16.msra.mxu0 %v414
        %454 = vmatpush.bf16.msra.mxu0 %v411
        %455 = vmatpush.bf16.msra.mxu0 %v408
        %456 = vmatpush.bf16.msra.mxu0 %v405
        %457 = vmatpush.bf16.msra.mxu0 %v402
        %458 = vmatmul.bf16.gmra.mxu0 %v278
        %v459 = vpop.f32.mrf.mxu0
        %v460 = vadd.f32 %v316, %v459
        %v461 = vpop.f32.mrf.mxu0
        %v462 = vadd.f32 %v316, %v461
        %463 = vmatmul.bf16.gmra.mxu0 %v279
        %v464 = vpop.f32.mrf.mxu0
        %v465 = vadd.f32 %v316, %v464
        %v466 = vpop.f32.mrf.mxu0
        %v467 = vadd.f32 %v316, %v466
        %468 = vmatmul.bf16.gmra.mxu0 %v280
        %v469 = vpop.f32.mrf.mxu0
        %v470 = vadd.f32 %v316, %v469
        %v471 = vpop.f32.mrf.mxu0
        %v472 = vadd.f32 %v316, %v471
        %473 = vmatmul.bf16.gmra.mxu0 %v281
        %v474 = vpop.f32.mrf.mxu0
        %v475 = vadd.f32 %v316, %v474
        %v476 = vpop.f32.mrf.mxu0
        %v477 = vadd.f32 %v316, %v476
        %478 = vdwg.mxu0
        %479 = vmatpush.bf16.msra.mxu0 %v424
        %480 = vmatpush.bf16.msra.mxu0 %v421
        %481 = vmatpush.bf16.msra.mxu0 %v418
        %482 = vmatpush.bf16.msra.mxu0 %v415
        %483 = vmatpush.bf16.msra.mxu0 %v412
        %484 = vmatpush.bf16.msra.mxu0 %v409
        %485 = vmatpush.bf16.msra.mxu0 %v406
        %486 = vmatpush.bf16.msra.mxu0 %v403
        %487 = vmatmul.bf16.gmra.mxu0 %v278
        %v488 = vpop.f32.mrf.mxu0
        %v489 = vadd.f32 %v317, %v488
        %v490 = vpop.f32.mrf.mxu0
        %v491 = vadd.f32 %v317, %v490
        %492 = vmatmul.bf16.gmra.mxu0 %v279
        %v493 = vpop.f32.mrf.mxu0
        %v494 = vadd.f32 %v317, %v493
        %v495 = vpop.f32.mrf.mxu0
        %v496 = vadd.f32 %v317, %v495
        %497 = vmatmul.bf16.gmra.mxu0 %v280
        %v498 = vpop.f32.mrf.mxu0
        %v499 = vadd.f32 %v317, %v498
        %v500 = vpop.f32.mrf.mxu0
        %v501 = vadd.f32 %v317, %v500
        %502 = vmatmul.bf16.gmra.mxu0 %v281
        %v503 = vpop.f32.mrf.mxu0
        %v504 = vadd.f32 %v317, %v503
        %v505 = vpop.f32.mrf.mxu0
        %v506 = vadd.f32 %v317, %v505
        %507 = vdwg.mxu0
        %508 = vmatpush.bf16.msra.mxu0 %v425
        %509 = vmatpush.bf16.msra.mxu0 %v422
        %510 = vmatpush.bf16.msra.mxu0 %v419
        %511 = vmatpush.bf16.msra.mxu0 %v416
        %512 = vmatpush.bf16.msra.mxu0 %v413
        %513 = vmatpush.bf16.msra.mxu0 %v410
        %514 = vmatpush.bf16.msra.mxu0 %v407
        %515 = vmatpush.bf16.msra.mxu0 %v404
        %516 = vmatmul.bf16.gmra.mxu0 %v278
        %v517 = vpop.f32.mrf.mxu0
        %v518 = vadd.f32 %v318, %v517
        %v519 = vpop.f32.mrf.mxu0
        %v520 = vadd.f32 %v318, %v519
        %521 = vmatmul.bf16.gmra.mxu0 %v279
        %v522 = vpop.f32.mrf.mxu0
        %v523 = vadd.f32 %v318, %v522
        %v524 = vpop.f32.mrf.mxu0
        %v525 = vadd.f32 %v318, %v524
        %526 = vmatmul.bf16.gmra.mxu0 %v280
        %v527 = vpop.f32.mrf.mxu0
        %v528 = vadd.f32 %v318, %v527
        %v529 = vpop.f32.mrf.mxu0
        %v530 = vadd.f32 %v318, %v529
        %531 = vmatmul.bf16.gmra.mxu0 %v281
        %v532 = vpop.f32.mrf.mxu0
        %v533 = vadd.f32 %v318, %v532
        %v534 = vpop.f32.mrf.mxu0
        %v535 = vadd.f32 %v318, %v534
        %536 = vdwg.mxu0
        %537 = vst [vmem:[#allocation2] sm:$0xff] %v460
        %538 = vst [vmem:[#allocation2 + $0x8] sm:$0xff] %v489
        %539 = vst [vmem:[#allocation2 + $0x10] sm:$0xff] %v518
        %540 = vst [vmem:[#allocation2 + $0x18] sm:$0xff] %v462
        %541 = vst [vmem:[#allocation2 + $0x20] sm:$0xff] %v491
        %542 = vst [vmem:[#allocation2 + $0x28] sm:$0xff] %v520
        %543 = vst [vmem:[#allocation2 + $0x30] sm:$0xff] %v465
        %544 = vst [vmem:[#allocation2 + $0x38] sm:$0xff] %v494
        %545 = vst [vmem:[#allocation2 + $0x40] sm:$0xff] %v523
        %546 = vst [vmem:[#allocation2 + $0x48] sm:$0xff] %v467
        %547 = vst [vmem:[#allocation2 + $0x50] sm:$0xff] %v496
        %548 = vst [vmem:[#allocation2 + $0x58] sm:$0xff] %v525
        %549 = vst [vmem:[#allocation2 + $0x60] sm:$0xff] %v470
        %550 = vst [vmem:[#allocation2 + $0x68] sm:$0xff] %v499
        %551 = vst [vmem:[#allocation2 + $0x70] sm:$0xff] %v528
        %552 = vst [vmem:[#allocation2 + $0x78] sm:$0xff] %v472
        %553 = vst [vmem:[#allocation2 + $0x80] sm:$0xff] %v501
        %554 = vst [vmem:[#allocation2 + $0x88] sm:$0xff] %v530
        %555 = vst [vmem:[#allocation2 + $0x90] sm:$0xff] %v475
        %556 = vst [vmem:[#allocation2 + $0x98] sm:$0xff] %v504
        %557 = vst [vmem:[#allocation2 + $0xa0] sm:$0xff] %v533
        %558 = vst [vmem:[#allocation2 + $0xa8] sm:$0xff] %v477
        %559 = vst [vmem:[#allocation2 + $0xb0] sm:$0xff] %v506
        %560 = vst [vmem:[#allocation2 + $0xb8] sm:$0xff] %v535
        %v561 = vld [vmem:[%s264] sm:$0xff]
        %s562 = smul.u32 0, 3
        %s563 = smul.addr %s562, 8
        %s564 = scalar_lea.vmem [#allocation2], %s563
        %v565 = vld [vmem:[%s564] sm:$0xff]
        %v566 = vld [vmem:[%s564 + $0x8] sm:$0xff]
        %v567 = vld [vmem:[%s564 + $0x10] sm:$0xff]
        %v568 = vld [vmem:[#allocation3] sm:$0xff]
        %v569 = vld [vmem:[#allocation3 + $0x8] sm:$0xff]
        %v570 = vld [vmem:[#allocation3 + $0x10] sm:$0xff]
        %v571 = vld [vmem:[#allocation3 + $0x18] sm:$0xff]
        %v572 = vld [vmem:[#allocation3 + $0x20] sm:$0xff]
        %v573 = vld [vmem:[#allocation3 + $0x28] sm:$0xff]
        %v574 = vld [vmem:[#allocation3 + $0x30] sm:$0xff]
        %v575 = vld [vmem:[#allocation3 + $0x38] sm:$0xff]
        %v576 = vld [vmem:[#allocation3 + $0x40] sm:$0xff]
        %v577 = vld [vmem:[#allocation3 + $0x48] sm:$0xff]
        %v578 = vld [vmem:[#allocation3 + $0x50] sm:$0xff]
        %v579 = vld [vmem:[#allocation3 + $0x58] sm:$0xff]
        %v580 = vld [vmem:[#allocation3 + $0x60] sm:$0xff]
        %v581 = vld [vmem:[#allocation3 + $0x68] sm:$0xff]
        %v582 = vld [vmem:[#allocation3 + $0x70] sm:$0xff]
        %v583 = vld [vmem:[#allocation3 + $0x78] sm:$0xff]
        %v584 = vld [vmem:[#allocation3 + $0x80] sm:$0xff]
        %v585 = vld [vmem:[#allocation3 + $0x88] sm:$0xff]
        %v586 = vld [vmem:[#allocation3 + $0x90] sm:$0xff]
        %v587 = vld [vmem:[#allocation3 + $0x98] sm:$0xff]
        %v588 = vld [vmem:[#allocation3 + $0xa0] sm:$0xff]
        %v589 = vld [vmem:[#allocation3 + $0xa8] sm:$0xff]
        %v590 = vld [vmem:[#allocation3 + $0xb0] sm:$0xff]
        %v591 = vld [vmem:[#allocation3 + $0xb8] sm:$0xff]
        %v592 = vld [vmem:[#allocation3 + $0xc0] sm:$0xff]
        %v593 = vld [vmem:[#allocation3 + $0xc8] sm:$0xff]
        %v594 = vld [vmem:[#allocation3 + $0xd0] sm:$0xff]
        %v595 = vld [vmem:[#allocation3 + $0xd8] sm:$0xff]
        %v596 = vld [vmem:[#allocation3 + $0xe0] sm:$0xff]
        %v597 = vld [vmem:[#allocation3 + $0xe8] sm:$0xff]
        %v598 = vld [vmem:[#allocation3 + $0xf0] sm:$0xff]
        %v599 = vld [vmem:[#allocation3 + $0xf8] sm:$0xff]
        %v600 = vld [vmem:[#allocation3 + $0x100] sm:$0xff]
        %v601 = vld [vmem:[#allocation3 + $0x108] sm:$0xff]
        %v602 = vld [vmem:[#allocation3 + $0x110] sm:$0xff]
        %v603 = vld [vmem:[#allocation3 + $0x118] sm:$0xff]
        %v604 = vld [vmem:[#allocation3 + $0x120] sm:$0xff]
        %v605 = vld [vmem:[#allocation3 + $0x128] sm:$0xff]
        %v606 = vld [vmem:[#allocation3 + $0x130] sm:$0xff]
        %v607 = vld [vmem:[#allocation3 + $0x138] sm:$0xff]
        %v608 = vld [vmem:[#allocation3 + $0x140] sm:$0xff]
        %v609 = vld [vmem:[#allocation3 + $0x148] sm:$0xff]
        %v610 = vld [vmem:[#allocation3 + $0x150] sm:$0xff]
        %v611 = vld [vmem:[#allocation3 + $0x158] sm:$0xff]
        %v612 = vld [vmem:[#allocation3 + $0x160] sm:$0xff]
        %v613 = vld [vmem:[#allocation3 + $0x168] sm:$0xff]
        %v614 = vld [vmem:[#allocation3 + $0x170] sm:$0xff]
        %v615 = vld [vmem:[#allocation3 + $0x178] sm:$0xff]
        %616 = vmatpush.msra.mxu0 %v613
        %617 = vmatpush.msra.mxu0 %v610
        %618 = vmatpush.msra.mxu0 %v607
        %619 = vmatpush.msra.mxu0 %v604
        %620 = vmatpush.msra.mxu0 %v601
        %621 = vmatpush.msra.mxu0 %v598
        %622 = vmatpush.msra.mxu0 %v595
        %623 = vmatpush.msra.mxu0 %v592
        %624 = vmatpush.msra.mxu0 %v589
        %625 = vmatpush.msra.mxu0 %v586
        %626 = vmatpush.msra.mxu0 %v583
        %627 = vmatpush.msra.mxu0 %v580
        %628 = vmatpush.msra.mxu0 %v577
        %629 = vmatpush.msra.mxu0 %v574
        %630 = vmatpush.msra.mxu0 %v571
        %631 = vmatpush.msra.mxu0 %v568
        %632 = vmatmul.f32.gmra.mxu0 %v561
        %v633 = vpop.f32.mrf.mxu0
        %v634 = vadd.f32 0.0, %v633
        %635 = vdwg.mxu0
        %636 = vmatpush.msra.mxu0 %v614
        %637 = vmatpush.msra.mxu0 %v611
        %638 = vmatpush.msra.mxu0 %v608
        %639 = vmatpush.msra.mxu0 %v605
        %640 = vmatpush.msra.mxu0 %v602
        %641 = vmatpush.msra.mxu0 %v599
        %642 = vmatpush.msra.mxu0 %v596
        %643 = vmatpush.msra.mxu0 %v593
        %644 = vmatpush.msra.mxu0 %v590
        %645 = vmatpush.msra.mxu0 %v587
        %646 = vmatpush.msra.mxu0 %v584
        %647 = vmatpush.msra.mxu0 %v581
        %648 = vmatpush.msra.mxu0 %v578
        %649 = vmatpush.msra.mxu0 %v575
        %650 = vmatpush.msra.mxu0 %v572
        %651 = vmatpush.msra.mxu0 %v569
        %652 = vmatmul.f32.gmra.mxu0 %v561
        %v653 = vpop.f32.mrf.mxu0
        %v654 = vadd.f32 0.0, %v653
        %655 = vdwg.mxu0
        %656 = vmatpush.msra.mxu0 %v615
        %657 = vmatpush.msra.mxu0 %v612
        %658 = vmatpush.msra.mxu0 %v609
        %659 = vmatpush.msra.mxu0 %v606
        %660 = vmatpush.msra.mxu0 %v603
        %661 = vmatpush.msra.mxu0 %v600
        %662 = vmatpush.msra.mxu0 %v597
        %663 = vmatpush.msra.mxu0 %v594
        %664 = vmatpush.msra.mxu0 %v591
        %665 = vmatpush.msra.mxu0 %v588
        %666 = vmatpush.msra.mxu0 %v585
        %667 = vmatpush.msra.mxu0 %v582
        %668 = vmatpush.msra.mxu0 %v579
        %669 = vmatpush.msra.mxu0 %v576
        %670 = vmatpush.msra.mxu0 %v573
        %671 = vmatpush.msra.mxu0 %v570
        %672 = vmatmul.f32.gmra.mxu0 %v561
        %v673 = vpop.f32.mrf.mxu0
        %v674 = vadd.f32 0.0, %v673
        %675 = vdwg.mxu0
        %v676 = vadd.f32 %v565, %v634
        %v677 = vxor.u32 %v676, 2147483648
        %v678 = vmul.f32 %v677, 1.442695
        %v679 = vpow.pop %v678
        %v680 = vadd.f32 %v679, 1.0
        %v681 = vrcp.pop %v680
        %v682 = vmul.f32 %v680, %v681
        %v683 = vsub.f32 1.0, %v682
        %v684 = vmul.f32 %v681, %v683
        %v685 = vadd.f32 %v681, %v684
        %vm686 = vweird.f32 %v680
        %vm687 = vweird.f32 %v681
        %vm688 = vmor %vm686, %vm687
        %v689 = vsel %vm688, %v681, %v685
        %v690 = vand.u32 2147483647, %v680
        %vm691 = vcmp.eq.f32.partialorder %v690, 8.507059e+37
        %v692 = vand.u32 %v680, 2147483648
        %v693 = vor.u32 1.1754944e-38, %v692
        %v694 = vsel %vm691, %v693, %v689
        %v695 = vmul.f32 1.0, %v694
        %v696 = vadd.f32 %v566, %v654
        %v697 = vxor.u32 %v696, 2147483648
        %v698 = vmul.f32 %v697, 1.442695
        %v699 = vpow.pop %v698
        %v700 = vadd.f32 %v699, 1.0
        %v701 = vrcp.pop %v700
        %v702 = vmul.f32 %v700, %v701
        %v703 = vsub.f32 1.0, %v702
        %v704 = vmul.f32 %v701, %v703
        %v705 = vadd.f32 %v701, %v704
        %vm706 = vweird.f32 %v700
        %vm707 = vweird.f32 %v701
        %vm708 = vmor %vm706, %vm707
        %v709 = vsel %vm708, %v701, %v705
        %v710 = vand.u32 2147483647, %v700
        %vm711 = vcmp.eq.f32.partialorder %v710, 8.507059e+37
        %v712 = vand.u32 %v700, 2147483648
        %v713 = vor.u32 1.1754944e-38, %v712
        %v714 = vsel %vm711, %v713, %v709
        %v715 = vmul.f32 1.0, %v714
        %v716 = vld [vmem:[%s4] sm:$0x1]
        %v718 = vperm.slane %v716, 0
        %v720 = vadd.f32 %v674, %v718
        %v721 = vmul.f32 %v695, %v720
        %v722 = vadd.f32 %v567, %v721
        %v723 = vtanh.pop %v722
        %v724 = vsub.f32 1.0, %v715
        %v725 = vmul.f32 %v724, %v723
        %v726 = vmul.f32 %v715, %v561
        %v727 = vadd.f32 %v725, %v726
        %s728 = smul.u32 %s22, 8
        %p729 = scmp.lt.s32.totalorder %s728, 12
        %s730 = scalar_select %p729, 1, 0
        %v731 = vstv %s730
        %vm732 = vcmp.eq.s32.totalorder %v731, 1
        %v733 = vsel %vm732, %v727, %v561
        %s734 = smul.u32 1, 3
        %s735 = smul.addr %s734, 8
        %s736 = scalar_lea.vmem [#allocation2], %s735
        %v737 = vld [vmem:[%s736] sm:$0xff]
        %v738 = vld [vmem:[%s736 + $0x8] sm:$0xff]
        %v739 = vld [vmem:[%s736 + $0x10] sm:$0xff]
        %740 = vmatpush.msra.mxu0 %v613
        %741 = vmatpush.msra.mxu0 %v610
        %742 = vmatpush.msra.mxu0 %v607
        %743 = vmatpush.msra.mxu0 %v604
        %744 = vmatpush.msra.mxu0 %v601
        %745 = vmatpush.msra.mxu0 %v598
        %746 = vmatpush.msra.mxu0 %v595
        %747 = vmatpush.msra.mxu0 %v592
        %748 = vmatpush.msra.mxu0 %v589
        %749 = vmatpush.msra.mxu0 %v586
        %750 = vmatpush.msra.mxu0 %v583
        %751 = vmatpush.msra.mxu0 %v580
        %752 = vmatpush.msra.mxu0 %v577
        %753 = vmatpush.msra.mxu0 %v574
        %754 = vmatpush.msra.mxu0 %v571
        %755 = vmatpush.msra.mxu0 %v568
        %756 = vmatmul.f32.gmra.mxu0 %v733
        %v757 = vpop.f32.mrf.mxu0
        %v758 = vadd.f32 0.0, %v757
        %759 = vdwg.mxu0
        %760 = vmatpush.msra.mxu0 %v614
        %761 = vmatpush.msra.mxu0 %v611
        %762 = vmatpush.msra.mxu0 %v608
        %763 = vmatpush.msra.mxu0 %v605
        %764 = vmatpush.msra.mxu0 %v602
        %765 = vmatpush.msra.mxu0 %v599
        %766 = vmatpush.msra.mxu0 %v596
        %767 = vmatpush.msra.mxu0 %v593
        %768 = vmatpush.msra.mxu0 %v590
        %769 = vmatpush.msra.mxu0 %v587
        %770 = vmatpush.msra.mxu0 %v584
        %771 = vmatpush.msra.mxu0 %v581
        %772 = vmatpush.msra.mxu0 %v578
        %773 = vmatpush.msra.mxu0 %v575
        %774 = vmatpush.msra.mxu0 %v572
        %775 = vmatpush.msra.mxu0 %v569
        %776 = vmatmul.f32.gmra.mxu0 %v733
        %v777 = vpop.f32.mrf.mxu0
        %v778 = vadd.f32 0.0, %v777
        %779 = vdwg.mxu0
        %780 = vmatpush.msra.mxu0 %v615
        %781 = vmatpush.msra.mxu0 %v612
        %782 = vmatpush.msra.mxu0 %v609
        %783 = vmatpush.msra.mxu0 %v606
        %784 = vmatpush.msra.mxu0 %v603
        %785 = vmatpush.msra.mxu0 %v600
        %786 = vmatpush.msra.mxu0 %v597
        %787 = vmatpush.msra.mxu0 %v594
        %788 = vmatpush.msra.mxu0 %v591
        %789 = vmatpush.msra.mxu0 %v588
        %790 = vmatpush.msra.mxu0 %v585
        %791 = vmatpush.msra.mxu0 %v582
        %792 = vmatpush.msra.mxu0 %v579
        %793 = vmatpush.msra.mxu0 %v576
        %794 = vmatpush.msra.mxu0 %v573
        %795 = vmatpush.msra.mxu0 %v570
        %796 = vmatmul.f32.gmra.mxu0 %v733
        %v797 = vpop.f32.mrf.mxu0
        %v798 = vadd.f32 0.0, %v797
        %799 = vdwg.mxu0
        %v800 = vadd.f32 %v737, %v758
        %v801 = vxor.u32 %v800, 2147483648
        %v802 = vmul.f32 %v801, 1.442695
        %v803 = vpow.pop %v802
        %v804 = vadd.f32 %v803, 1.0
        %v805 = vrcp.pop %v804
        %v806 = vmul.f32 %v804, %v805
        %v807 = vsub.f32 1.0, %v806
        %v808 = vmul.f32 %v805, %v807
        %v809 = vadd.f32 %v805, %v808
        %vm810 = vweird.f32 %v804
        %vm811 = vweird.f32 %v805
        %vm812 = vmor %vm810, %vm811
        %v813 = vsel %vm812, %v805, %v809
        %v814 = vand.u32 2147483647, %v804
        %vm815 = vcmp.eq.f32.partialorder %v814, 8.507059e+37
        %v816 = vand.u32 %v804, 2147483648
        %v817 = vor.u32 1.1754944e-38, %v816
        %v818 = vsel %vm815, %v817, %v813
        %v819 = vmul.f32 1.0, %v818
        %v820 = vadd.f32 %v738, %v778
        %v821 = vxor.u32 %v820, 2147483648
        %v822 = vmul.f32 %v821, 1.442695
        %v823 = vpow.pop %v822
        %v824 = vadd.f32 %v823, 1.0
        %v825 = vrcp.pop %v824
        %v826 = vmul.f32 %v824, %v825
        %v827 = vsub.f32 1.0, %v826
        %v828 = vmul.f32 %v825, %v827
        %v829 = vadd.f32 %v825, %v828
        %vm830 = vweird.f32 %v824
        %vm831 = vweird.f32 %v825
        %vm832 = vmor %vm830, %vm831
        %v833 = vsel %vm832, %v825, %v829
        %v834 = vand.u32 2147483647, %v824
        %vm835 = vcmp.eq.f32.partialorder %v834, 8.507059e+37
        %v836 = vand.u32 %v824, 2147483648
        %v837 = vor.u32 1.1754944e-38, %v836
        %v838 = vsel %vm835, %v837, %v833
        %v839 = vmul.f32 1.0, %v838
        %v840 = vadd.f32 %v798, %v718
        %v841 = vmul.f32 %v819, %v840
        %v842 = vadd.f32 %v739, %v841
        %v843 = vtanh.pop %v842
        %v844 = vsub.f32 1.0, %v839
        %v845 = vmul.f32 %v844, %v843
        %v846 = vmul.f32 %v839, %v733
        %v847 = vadd.f32 %v845, %v846
        %s848 = sadd.s32 %s728, 1
        %p849 = scmp.lt.s32.totalorder %s848, 12
        %s850 = scalar_select %p849, 1, 0
        %v851 = vstv %s850
        %vm852 = vcmp.eq.s32.totalorder %v851, 1
        %v853 = vsel %vm852, %v847, %v733
        %s854 = smul.u32 2, 3
        %s855 = smul.addr %s854, 8
        %s856 = scalar_lea.vmem [#allocation2], %s855
        %v857 = vld [vmem:[%s856] sm:$0xff]
        %v858 = vld [vmem:[%s856 + $0x8] sm:$0xff]
        %v859 = vld [vmem:[%s856 + $0x10] sm:$0xff]
        %860 = vmatpush.msra.mxu0 %v613
        %861 = vmatpush.msra.mxu0 %v610
        %862 = vmatpush.msra.mxu0 %v607
        %863 = vmatpush.msra.mxu0 %v604
        %864 = vmatpush.msra.mxu0 %v601
        %865 = vmatpush.msra.mxu0 %v598
        %866 = vmatpush.msra.mxu0 %v595
        %867 = vmatpush.msra.mxu0 %v592
        %868 = vmatpush.msra.mxu0 %v589
        %869 = vmatpush.msra.mxu0 %v586
        %870 = vmatpush.msra.mxu0 %v583
        %871 = vmatpush.msra.mxu0 %v580
        %872 = vmatpush.msra.mxu0 %v577
        %873 = vmatpush.msra.mxu0 %v574
        %874 = vmatpush.msra.mxu0 %v571
        %875 = vmatpush.msra.mxu0 %v568
        %876 = vmatmul.f32.gmra.mxu0 %v853
        %v877 = vpop.f32.mrf.mxu0
        %v878 = vadd.f32 0.0, %v877
        %879 = vdwg.mxu0
        %880 = vmatpush.msra.mxu0 %v614
        %881 = vmatpush.msra.mxu0 %v611
        %882 = vmatpush.msra.mxu0 %v608
        %883 = vmatpush.msra.mxu0 %v605
        %884 = vmatpush.msra.mxu0 %v602
        %885 = vmatpush.msra.mxu0 %v599
        %886 = vmatpush.msra.mxu0 %v596
        %887 = vmatpush.msra.mxu0 %v593
        %888 = vmatpush.msra.mxu0 %v590
        %889 = vmatpush.msra.mxu0 %v587
        %890 = vmatpush.msra.mxu0 %v584
        %891 = vmatpush.msra.mxu0 %v581
        %892 = vmatpush.msra.mxu0 %v578
        %893 = vmatpush.msra.mxu0 %v575
        %894 = vmatpush.msra.mxu0 %v572
        %895 = vmatpush.msra.mxu0 %v569
        %896 = vmatmul.f32.gmra.mxu0 %v853
        %v897 = vpop.f32.mrf.mxu0
        %v898 = vadd.f32 0.0, %v897
        %899 = vdwg.mxu0
        %900 = vmatpush.msra.mxu0 %v615
        %901 = vmatpush.msra.mxu0 %v612
        %902 = vmatpush.msra.mxu0 %v609
        %903 = vmatpush.msra.mxu0 %v606
        %904 = vmatpush.msra.mxu0 %v603
        %905 = vmatpush.msra.mxu0 %v600
        %906 = vmatpush.msra.mxu0 %v597
        %907 = vmatpush.msra.mxu0 %v594
        %908 = vmatpush.msra.mxu0 %v591
        %909 = vmatpush.msra.mxu0 %v588
        %910 = vmatpush.msra.mxu0 %v585
        %911 = vmatpush.msra.mxu0 %v582
        %912 = vmatpush.msra.mxu0 %v579
        %913 = vmatpush.msra.mxu0 %v576
        %914 = vmatpush.msra.mxu0 %v573
        %915 = vmatpush.msra.mxu0 %v570
        %916 = vmatmul.f32.gmra.mxu0 %v853
        %v917 = vpop.f32.mrf.mxu0
        %v918 = vadd.f32 0.0, %v917
        %919 = vdwg.mxu0
        %v920 = vadd.f32 %v857, %v878
        %v921 = vxor.u32 %v920, 2147483648
        %v922 = vmul.f32 %v921, 1.442695
        %v923 = vpow.pop %v922
        %v924 = vadd.f32 %v923, 1.0
        %v925 = vrcp.pop %v924
        %v926 = vmul.f32 %v924, %v925
        %v927 = vsub.f32 1.0, %v926
        %v928 = vmul.f32 %v925, %v927
        %v929 = vadd.f32 %v925, %v928
        %vm930 = vweird.f32 %v924
        %vm931 = vweird.f32 %v925
        %vm932 = vmor %vm930, %vm931
        %v933 = vsel %vm932, %v925, %v929
        %v934 = vand.u32 2147483647, %v924
        %vm935 = vcmp.eq.f32.partialorder %v934, 8.507059e+37
        %v936 = vand.u32 %v924, 2147483648
        %v937 = vor.u32 1.1754944e-38, %v936
        %v938 = vsel %vm935, %v937, %v933
        %v939 = vmul.f32 1.0, %v938
        %v940 = vadd.f32 %v858, %v898
        %v941 = vxor.u32 %v940, 2147483648
        %v942 = vmul.f32 %v941, 1.442695
        %v943 = vpow.pop %v942
        %v944 = vadd.f32 %v943, 1.0
        %v945 = vrcp.pop %v944
        %v946 = vmul.f32 %v944, %v945
        %v947 = vsub.f32 1.0, %v946
        %v948 = vmul.f32 %v945, %v947
        %v949 = vadd.f32 %v945, %v948
        %vm950 = vweird.f32 %v944
        %vm951 = vweird.f32 %v945
        %vm952 = vmor %vm950, %vm951
        %v953 = vsel %vm952, %v945, %v949
        %v954 = vand.u32 2147483647, %v944
        %vm955 = vcmp.eq.f32.partialorder %v954, 8.507059e+37
        %v956 = vand.u32 %v944, 2147483648
        %v957 = vor.u32 1.1754944e-38, %v956
        %v958 = vsel %vm955, %v957, %v953
        %v959 = vmul.f32 1.0, %v958
        %v960 = vadd.f32 %v918, %v718
        %v961 = vmul.f32 %v939, %v960
        %v962 = vadd.f32 %v859, %v961
        %v963 = vtanh.pop %v962
        %v964 = vsub.f32 1.0, %v959
        %v965 = vmul.f32 %v964, %v963
        %v966 = vmul.f32 %v959, %v853
        %v967 = vadd.f32 %v965, %v966
        %s968 = sadd.s32 %s728, 2
        %p969 = scmp.lt.s32.totalorder %s968, 12
        %s970 = scalar_select %p969, 1, 0
        %v971 = vstv %s970
        %vm972 = vcmp.eq.s32.totalorder %v971, 1
        %v973 = vsel %vm972, %v967, %v853
        %s974 = smul.u32 3, 3
        %s975 = smul.addr %s974, 8
        %s976 = scalar_lea.vmem [#allocation2], %s975
        %v977 = vld [vmem:[%s976] sm:$0xff]
        %v978 = vld [vmem:[%s976 + $0x8] sm:$0xff]
        %v979 = vld [vmem:[%s976 + $0x10] sm:$0xff]
        %980 = vmatpush.msra.mxu0 %v613
        %981 = vmatpush.msra.mxu0 %v610
        %982 = vmatpush.msra.mxu0 %v607
        %983 = vmatpush.msra.mxu0 %v604
        %984 = vmatpush.msra.mxu0 %v601
        %985 = vmatpush.msra.mxu0 %v598
        %986 = vmatpush.msra.mxu0 %v595
        %987 = vmatpush.msra.mxu0 %v592
        %988 = vmatpush.msra.mxu0 %v589
        %989 = vmatpush.msra.mxu0 %v586
        %990 = vmatpush.msra.mxu0 %v583
        %991 = vmatpush.msra.mxu0 %v580
        %992 = vmatpush.msra.mxu0 %v577
        %993 = vmatpush.msra.mxu0 %v574
        %994 = vmatpush.msra.mxu0 %v571
        %995 = vmatpush.msra.mxu0 %v568
        %996 = vmatmul.f32.gmra.mxu0 %v973
        %v997 = vpop.f32.mrf.mxu0
        %v998 = vadd.f32 0.0, %v997
        %999 = vdwg.mxu0
        %1000 = vmatpush.msra.mxu0 %v614
        %1001 = vmatpush.msra.mxu0 %v611
        %1002 = vmatpush.msra.mxu0 %v608
        %1003 = vmatpush.msra.mxu0 %v605
        %1004 = vmatpush.msra.mxu0 %v602
        %1005 = vmatpush.msra.mxu0 %v599
        %1006 = vmatpush.msra.mxu0 %v596
        %1007 = vmatpush.msra.mxu0 %v593
        %1008 = vmatpush.msra.mxu0 %v590
        %1009 = vmatpush.msra.mxu0 %v587
        %1010 = vmatpush.msra.mxu0 %v584
        %1011 = vmatpush.msra.mxu0 %v581
        %1012 = vmatpush.msra.mxu0 %v578
        %1013 = vmatpush.msra.mxu0 %v575
        %1014 = vmatpush.msra.mxu0 %v572
        %1015 = vmatpush.msra.mxu0 %v569
        %1016 = vmatmul.f32.gmra.mxu0 %v973
        %v1017 = vpop.f32.mrf.mxu0
        %v1018 = vadd.f32 0.0, %v1017
        %1019 = vdwg.mxu0
        %1020 = vmatpush.msra.mxu0 %v615
        %1021 = vmatpush.msra.mxu0 %v612
        %1022 = vmatpush.msra.mxu0 %v609
        %1023 = vmatpush.msra.mxu0 %v606
        %1024 = vmatpush.msra.mxu0 %v603
        %1025 = vmatpush.msra.mxu0 %v600
        %1026 = vmatpush.msra.mxu0 %v597
        %1027 = vmatpush.msra.mxu0 %v594
        %1028 = vmatpush.msra.mxu0 %v591
        %1029 = vmatpush.msra.mxu0 %v588
        %1030 = vmatpush.msra.mxu0 %v585
        %1031 = vmatpush.msra.mxu0 %v582
        %1032 = vmatpush.msra.mxu0 %v579
        %1033 = vmatpush.msra.mxu0 %v576
        %1034 = vmatpush.msra.mxu0 %v573
        %1035 = vmatpush.msra.mxu0 %v570
        %1036 = vmatmul.f32.gmra.mxu0 %v973
        %v1037 = vpop.f32.mrf.mxu0
        %v1038 = vadd.f32 0.0, %v1037
        %1039 = vdwg.mxu0
        %v1040 = vadd.f32 %v977, %v998
        %v1041 = vxor.u32 %v1040, 2147483648
        %v1042 = vmul.f32 %v1041, 1.442695
        %v1043 = vpow.pop %v1042
        %v1044 = vadd.f32 %v1043, 1.0
        %v1045 = vrcp.pop %v1044
        %v1046 = vmul.f32 %v1044, %v1045
        %v1047 = vsub.f32 1.0, %v1046
        %v1048 = vmul.f32 %v1045, %v1047
        %v1049 = vadd.f32 %v1045, %v1048
        %vm1050 = vweird.f32 %v1044
        %vm1051 = vweird.f32 %v1045
        %vm1052 = vmor %vm1050, %vm1051
        %v1053 = vsel %vm1052, %v1045, %v1049
        %v1054 = vand.u32 2147483647, %v1044
        %vm1055 = vcmp.eq.f32.partialorder %v1054, 8.507059e+37
        %v1056 = vand.u32 %v1044, 2147483648
        %v1057 = vor.u32 1.1754944e-38, %v1056
        %v1058 = vsel %vm1055, %v1057, %v1053
        %v1059 = vmul.f32 1.0, %v1058
        %v1060 = vadd.f32 %v978, %v1018
        %v1061 = vxor.u32 %v1060, 2147483648
        %v1062 = vmul.f32 %v1061, 1.442695
        %v1063 = vpow.pop %v1062
        %v1064 = vadd.f32 %v1063, 1.0
        %v1065 = vrcp.pop %v1064
        %v1066 = vmul.f32 %v1064, %v1065
        %v1067 = vsub.f32 1.0, %v1066
        %v1068 = vmul.f32 %v1065, %v1067
        %v1069 = vadd.f32 %v1065, %v1068
        %vm1070 = vweird.f32 %v1064
        %vm1071 = vweird.f32 %v1065
        %vm1072 = vmor %vm1070, %vm1071
        %v1073 = vsel %vm1072, %v1065, %v1069
        %v1074 = vand.u32 2147483647, %v1064
        %vm1075 = vcmp.eq.f32.partialorder %v1074, 8.507059e+37
        %v1076 = vand.u32 %v1064, 2147483648
        %v1077 = vor.u32 1.1754944e-38, %v1076
        %v1078 = vsel %vm1075, %v1077, %v1073
        %v1079 = vmul.f32 1.0, %v1078
        %v1080 = vadd.f32 %v1038, %v718
        %v1081 = vmul.f32 %v1059, %v1080
        %v1082 = vadd.f32 %v979, %v1081
        %v1083 = vtanh.pop %v1082
        %v1084 = vsub.f32 1.0, %v1079
        %v1085 = vmul.f32 %v1084, %v1083
        %v1086 = vmul.f32 %v1079, %v973
        %v1087 = vadd.f32 %v1085, %v1086
        %s1088 = sadd.s32 %s728, 3
        %p1089 = scmp.lt.s32.totalorder %s1088, 12
        %s1090 = scalar_select %p1089, 1, 0
        %v1091 = vstv %s1090
        %vm1092 = vcmp.eq.s32.totalorder %v1091, 1
        %v1093 = vsel %vm1092, %v1087, %v973
        %s1094 = smul.u32 4, 3
        %s1095 = smul.addr %s1094, 8
        %s1096 = scalar_lea.vmem [#allocation2], %s1095
        %v1097 = vld [vmem:[%s1096] sm:$0xff]
        %v1098 = vld [vmem:[%s1096 + $0x8] sm:$0xff]
        %v1099 = vld [vmem:[%s1096 + $0x10] sm:$0xff]
        %1100 = vmatpush.msra.mxu0 %v613
        %1101 = vmatpush.msra.mxu0 %v610
        %1102 = vmatpush.msra.mxu0 %v607
        %1103 = vmatpush.msra.mxu0 %v604
        %1104 = vmatpush.msra.mxu0 %v601
        %1105 = vmatpush.msra.mxu0 %v598
        %1106 = vmatpush.msra.mxu0 %v595
        %1107 = vmatpush.msra.mxu0 %v592
        %1108 = vmatpush.msra.mxu0 %v589
        %1109 = vmatpush.msra.mxu0 %v586
        %1110 = vmatpush.msra.mxu0 %v583
        %1111 = vmatpush.msra.mxu0 %v580
        %1112 = vmatpush.msra.mxu0 %v577
        %1113 = vmatpush.msra.mxu0 %v574
        %1114 = vmatpush.msra.mxu0 %v571
        %1115 = vmatpush.msra.mxu0 %v568
        %1116 = vmatmul.f32.gmra.mxu0 %v1093
        %v1117 = vpop.f32.mrf.mxu0
        %v1118 = vadd.f32 0.0, %v1117
        %1119 = vdwg.mxu0
        %1120 = vmatpush.msra.mxu0 %v614
        %1121 = vmatpush.msra.mxu0 %v611
        %1122 = vmatpush.msra.mxu0 %v608
        %1123 = vmatpush.msra.mxu0 %v605
        %1124 = vmatpush.msra.mxu0 %v602
        %1125 = vmatpush.msra.mxu0 %v599
        %1126 = vmatpush.msra.mxu0 %v596
        %1127 = vmatpush.msra.mxu0 %v593
        %1128 = vmatpush.msra.mxu0 %v590
        %1129 = vmatpush.msra.mxu0 %v587
        %1130 = vmatpush.msra.mxu0 %v584
        %1131 = vmatpush.msra.mxu0 %v581
        %1132 = vmatpush.msra.mxu0 %v578
        %1133 = vmatpush.msra.mxu0 %v575
        %1134 = vmatpush.msra.mxu0 %v572
        %1135 = vmatpush.msra.mxu0 %v569
        %1136 = vmatmul.f32.gmra.mxu0 %v1093
        %v1137 = vpop.f32.mrf.mxu0
        %v1138 = vadd.f32 0.0, %v1137
        %1139 = vdwg.mxu0
        %1140 = vmatpush.msra.mxu0 %v615
        %1141 = vmatpush.msra.mxu0 %v612
        %1142 = vmatpush.msra.mxu0 %v609
        %1143 = vmatpush.msra.mxu0 %v606
        %1144 = vmatpush.msra.mxu0 %v603
        %1145 = vmatpush.msra.mxu0 %v600
        %1146 = vmatpush.msra.mxu0 %v597
        %1147 = vmatpush.msra.mxu0 %v594
        %1148 = vmatpush.msra.mxu0 %v591
        %1149 = vmatpush.msra.mxu0 %v588
        %1150 = vmatpush.msra.mxu0 %v585
        %1151 = vmatpush.msra.mxu0 %v582
        %1152 = vmatpush.msra.mxu0 %v579
        %1153 = vmatpush.msra.mxu0 %v576
        %1154 = vmatpush.msra.mxu0 %v573
        %1155 = vmatpush.msra.mxu0 %v570
        %1156 = vmatmul.f32.gmra.mxu0 %v1093
        %v1157 = vpop.f32.mrf.mxu0
        %v1158 = vadd.f32 0.0, %v1157
        %1159 = vdwg.mxu0
        %v1160 = vadd.f32 %v1097, %v1118
        %v1161 = vxor.u32 %v1160, 2147483648
        %v1162 = vmul.f32 %v1161, 1.442695
        %v1163 = vpow.pop %v1162
        %v1164 = vadd.f32 %v1163, 1.0
        %v1165 = vrcp.pop %v1164
        %v1166 = vmul.f32 %v1164, %v1165
        %v1167 = vsub.f32 1.0, %v1166
        %v1168 = vmul.f32 %v1165, %v1167
        %v1169 = vadd.f32 %v1165, %v1168
        %vm1170 = vweird.f32 %v1164
        %vm1171 = vweird.f32 %v1165
        %vm1172 = vmor %vm1170, %vm1171
        %v1173 = vsel %vm1172, %v1165, %v1169
        %v1174 = vand.u32 2147483647, %v1164
        %vm1175 = vcmp.eq.f32.partialorder %v1174, 8.507059e+37
        %v1176 = vand.u32 %v1164, 2147483648
        %v1177 = vor.u32 1.1754944e-38, %v1176
        %v1178 = vsel %vm1175, %v1177, %v1173
        %v1179 = vmul.f32 1.0, %v1178
        %v1180 = vadd.f32 %v1098, %v1138
        %v1181 = vxor.u32 %v1180, 2147483648
        %v1182 = vmul.f32 %v1181, 1.442695
        %v1183 = vpow.pop %v1182
        %v1184 = vadd.f32 %v1183, 1.0
        %v1185 = vrcp.pop %v1184
        %v1186 = vmul.f32 %v1184, %v1185
        %v1187 = vsub.f32 1.0, %v1186
        %v1188 = vmul.f32 %v1185, %v1187
        %v1189 = vadd.f32 %v1185, %v1188
        %vm1190 = vweird.f32 %v1184
        %vm1191 = vweird.f32 %v1185
        %vm1192 = vmor %vm1190, %vm1191
        %v1193 = vsel %vm1192, %v1185, %v1189
        %v1194 = vand.u32 2147483647, %v1184
        %vm1195 = vcmp.eq.f32.partialorder %v1194, 8.507059e+37
        %v1196 = vand.u32 %v1184, 2147483648
        %v1197 = vor.u32 1.1754944e-38, %v1196
        %v1198 = vsel %vm1195, %v1197, %v1193
        %v1199 = vmul.f32 1.0, %v1198
        %v1200 = vadd.f32 %v1158, %v718
        %v1201 = vmul.f32 %v1179, %v1200
        %v1202 = vadd.f32 %v1099, %v1201
        %v1203 = vtanh.pop %v1202
        %v1204 = vsub.f32 1.0, %v1199
        %v1205 = vmul.f32 %v1204, %v1203
        %v1206 = vmul.f32 %v1199, %v1093
        %v1207 = vadd.f32 %v1205, %v1206
        %s1208 = sadd.s32 %s728, 4
        %p1209 = scmp.lt.s32.totalorder %s1208, 12
        %s1210 = scalar_select %p1209, 1, 0
        %v1211 = vstv %s1210
        %vm1212 = vcmp.eq.s32.totalorder %v1211, 1
        %v1213 = vsel %vm1212, %v1207, %v1093
        %s1214 = smul.u32 5, 3
        %s1215 = smul.addr %s1214, 8
        %s1216 = scalar_lea.vmem [#allocation2], %s1215
        %v1217 = vld [vmem:[%s1216] sm:$0xff]
        %v1218 = vld [vmem:[%s1216 + $0x8] sm:$0xff]
        %v1219 = vld [vmem:[%s1216 + $0x10] sm:$0xff]
        %1220 = vmatpush.msra.mxu0 %v613
        %1221 = vmatpush.msra.mxu0 %v610
        %1222 = vmatpush.msra.mxu0 %v607
        %1223 = vmatpush.msra.mxu0 %v604
        %1224 = vmatpush.msra.mxu0 %v601
        %1225 = vmatpush.msra.mxu0 %v598
        %1226 = vmatpush.msra.mxu0 %v595
        %1227 = vmatpush.msra.mxu0 %v592
        %1228 = vmatpush.msra.mxu0 %v589
        %1229 = vmatpush.msra.mxu0 %v586
        %1230 = vmatpush.msra.mxu0 %v583
        %1231 = vmatpush.msra.mxu0 %v580
        %1232 = vmatpush.msra.mxu0 %v577
        %1233 = vmatpush.msra.mxu0 %v574
        %1234 = vmatpush.msra.mxu0 %v571
        %1235 = vmatpush.msra.mxu0 %v568
        %1236 = vmatmul.f32.gmra.mxu0 %v1213
        %v1237 = vpop.f32.mrf.mxu0
        %v1238 = vadd.f32 0.0, %v1237
        %1239 = vdwg.mxu0
        %1240 = vmatpush.msra.mxu0 %v614
        %1241 = vmatpush.msra.mxu0 %v611
        %1242 = vmatpush.msra.mxu0 %v608
        %1243 = vmatpush.msra.mxu0 %v605
        %1244 = vmatpush.msra.mxu0 %v602
        %1245 = vmatpush.msra.mxu0 %v599
        %1246 = vmatpush.msra.mxu0 %v596
        %1247 = vmatpush.msra.mxu0 %v593
        %1248 = vmatpush.msra.mxu0 %v590
        %1249 = vmatpush.msra.mxu0 %v587
        %1250 = vmatpush.msra.mxu0 %v584
        %1251 = vmatpush.msra.mxu0 %v581
        %1252 = vmatpush.msra.mxu0 %v578
        %1253 = vmatpush.msra.mxu0 %v575
        %1254 = vmatpush.msra.mxu0 %v572
        %1255 = vmatpush.msra.mxu0 %v569
        %1256 = vmatmul.f32.gmra.mxu0 %v1213
        %v1257 = vpop.f32.mrf.mxu0
        %v1258 = vadd.f32 0.0, %v1257
        %1259 = vdwg.mxu0
        %1260 = vmatpush.msra.mxu0 %v615
        %1261 = vmatpush.msra.mxu0 %v612
        %1262 = vmatpush.msra.mxu0 %v609
        %1263 = vmatpush.msra.mxu0 %v606
        %1264 = vmatpush.msra.mxu0 %v603
        %1265 = vmatpush.msra.mxu0 %v600
        %1266 = vmatpush.msra.mxu0 %v597
        %1267 = vmatpush.msra.mxu0 %v594
        %1268 = vmatpush.msra.mxu0 %v591
        %1269 = vmatpush.msra.mxu0 %v588
        %1270 = vmatpush.msra.mxu0 %v585
        %1271 = vmatpush.msra.mxu0 %v582
        %1272 = vmatpush.msra.mxu0 %v579
        %1273 = vmatpush.msra.mxu0 %v576
        %1274 = vmatpush.msra.mxu0 %v573
        %1275 = vmatpush.msra.mxu0 %v570
        %1276 = vmatmul.f32.gmra.mxu0 %v1213
        %v1277 = vpop.f32.mrf.mxu0
        %v1278 = vadd.f32 0.0, %v1277
        %1279 = vdwg.mxu0
        %v1280 = vadd.f32 %v1217, %v1238
        %v1281 = vxor.u32 %v1280, 2147483648
        %v1282 = vmul.f32 %v1281, 1.442695
        %v1283 = vpow.pop %v1282
        %v1284 = vadd.f32 %v1283, 1.0
        %v1285 = vrcp.pop %v1284
        %v1286 = vmul.f32 %v1284, %v1285
        %v1287 = vsub.f32 1.0, %v1286
        %v1288 = vmul.f32 %v1285, %v1287
        %v1289 = vadd.f32 %v1285, %v1288
        %vm1290 = vweird.f32 %v1284
        %vm1291 = vweird.f32 %v1285
        %vm1292 = vmor %vm1290, %vm1291
        %v1293 = vsel %vm1292, %v1285, %v1289
        %v1294 = vand.u32 2147483647, %v1284
        %vm1295 = vcmp.eq.f32.partialorder %v1294, 8.507059e+37
        %v1296 = vand.u32 %v1284, 2147483648
        %v1297 = vor.u32 1.1754944e-38, %v1296
        %v1298 = vsel %vm1295, %v1297, %v1293
        %v1299 = vmul.f32 1.0, %v1298
        %v1300 = vadd.f32 %v1218, %v1258
        %v1301 = vxor.u32 %v1300, 2147483648
        %v1302 = vmul.f32 %v1301, 1.442695
        %v1303 = vpow.pop %v1302
        %v1304 = vadd.f32 %v1303, 1.0
        %v1305 = vrcp.pop %v1304
        %v1306 = vmul.f32 %v1304, %v1305
        %v1307 = vsub.f32 1.0, %v1306
        %v1308 = vmul.f32 %v1305, %v1307
        %v1309 = vadd.f32 %v1305, %v1308
        %vm1310 = vweird.f32 %v1304
        %vm1311 = vweird.f32 %v1305
        %vm1312 = vmor %vm1310, %vm1311
        %v1313 = vsel %vm1312, %v1305, %v1309
        %v1314 = vand.u32 2147483647, %v1304
        %vm1315 = vcmp.eq.f32.partialorder %v1314, 8.507059e+37
        %v1316 = vand.u32 %v1304, 2147483648
        %v1317 = vor.u32 1.1754944e-38, %v1316
        %v1318 = vsel %vm1315, %v1317, %v1313
        %v1319 = vmul.f32 1.0, %v1318
        %v1320 = vadd.f32 %v1278, %v718
        %v1321 = vmul.f32 %v1299, %v1320
        %v1322 = vadd.f32 %v1219, %v1321
        %v1323 = vtanh.pop %v1322
        %v1324 = vsub.f32 1.0, %v1319
        %v1325 = vmul.f32 %v1324, %v1323
        %v1326 = vmul.f32 %v1319, %v1213
        %v1327 = vadd.f32 %v1325, %v1326
        %s1328 = sadd.s32 %s728, 5
        %p1329 = scmp.lt.s32.totalorder %s1328, 12
        %s1330 = scalar_select %p1329, 1, 0
        %v1331 = vstv %s1330
        %vm1332 = vcmp.eq.s32.totalorder %v1331, 1
        %v1333 = vsel %vm1332, %v1327, %v1213
        %s1334 = smul.u32 6, 3
        %s1335 = smul.addr %s1334, 8
        %s1336 = scalar_lea.vmem [#allocation2], %s1335
        %v1337 = vld [vmem:[%s1336] sm:$0xff]
        %v1338 = vld [vmem:[%s1336 + $0x8] sm:$0xff]
        %v1339 = vld [vmem:[%s1336 + $0x10] sm:$0xff]
        %1340 = vmatpush.msra.mxu0 %v613
        %1341 = vmatpush.msra.mxu0 %v610
        %1342 = vmatpush.msra.mxu0 %v607
        %1343 = vmatpush.msra.mxu0 %v604
        %1344 = vmatpush.msra.mxu0 %v601
        %1345 = vmatpush.msra.mxu0 %v598
        %1346 = vmatpush.msra.mxu0 %v595
        %1347 = vmatpush.msra.mxu0 %v592
        %1348 = vmatpush.msra.mxu0 %v589
        %1349 = vmatpush.msra.mxu0 %v586
        %1350 = vmatpush.msra.mxu0 %v583
        %1351 = vmatpush.msra.mxu0 %v580
        %1352 = vmatpush.msra.mxu0 %v577
        %1353 = vmatpush.msra.mxu0 %v574
        %1354 = vmatpush.msra.mxu0 %v571
        %1355 = vmatpush.msra.mxu0 %v568
        %1356 = vmatmul.f32.gmra.mxu0 %v1333
        %v1357 = vpop.f32.mrf.mxu0
        %v1358 = vadd.f32 0.0, %v1357
        %1359 = vdwg.mxu0
        %1360 = vmatpush.msra.mxu0 %v614
        %1361 = vmatpush.msra.mxu0 %v611
        %1362 = vmatpush.msra.mxu0 %v608
        %1363 = vmatpush.msra.mxu0 %v605
        %1364 = vmatpush.msra.mxu0 %v602
        %1365 = vmatpush.msra.mxu0 %v599
        %1366 = vmatpush.msra.mxu0 %v596
        %1367 = vmatpush.msra.mxu0 %v593
        %1368 = vmatpush.msra.mxu0 %v590
        %1369 = vmatpush.msra.mxu0 %v587
        %1370 = vmatpush.msra.mxu0 %v584
        %1371 = vmatpush.msra.mxu0 %v581
        %1372 = vmatpush.msra.mxu0 %v578
        %1373 = vmatpush.msra.mxu0 %v575
        %1374 = vmatpush.msra.mxu0 %v572
        %1375 = vmatpush.msra.mxu0 %v569
        %1376 = vmatmul.f32.gmra.mxu0 %v1333
        %v1377 = vpop.f32.mrf.mxu0
        %v1378 = vadd.f32 0.0, %v1377
        %1379 = vdwg.mxu0
        %1380 = vmatpush.msra.mxu0 %v615
        %1381 = vmatpush.msra.mxu0 %v612
        %1382 = vmatpush.msra.mxu0 %v609
        %1383 = vmatpush.msra.mxu0 %v606
        %1384 = vmatpush.msra.mxu0 %v603
        %1385 = vmatpush.msra.mxu0 %v600
        %1386 = vmatpush.msra.mxu0 %v597
        %1387 = vmatpush.msra.mxu0 %v594
        %1388 = vmatpush.msra.mxu0 %v591
        %1389 = vmatpush.msra.mxu0 %v588
        %1390 = vmatpush.msra.mxu0 %v585
        %1391 = vmatpush.msra.mxu0 %v582
        %1392 = vmatpush.msra.mxu0 %v579
        %1393 = vmatpush.msra.mxu0 %v576
        %1394 = vmatpush.msra.mxu0 %v573
        %1395 = vmatpush.msra.mxu0 %v570
        %1396 = vmatmul.f32.gmra.mxu0 %v1333
        %v1397 = vpop.f32.mrf.mxu0
        %v1398 = vadd.f32 0.0, %v1397
        %1399 = vdwg.mxu0
        %v1400 = vadd.f32 %v1337, %v1358
        %v1401 = vxor.u32 %v1400, 2147483648
        %v1402 = vmul.f32 %v1401, 1.442695
        %v1403 = vpow.pop %v1402
        %v1404 = vadd.f32 %v1403, 1.0
        %v1405 = vrcp.pop %v1404
        %v1406 = vmul.f32 %v1404, %v1405
        %v1407 = vsub.f32 1.0, %v1406
        %v1408 = vmul.f32 %v1405, %v1407
        %v1409 = vadd.f32 %v1405, %v1408
        %vm1410 = vweird.f32 %v1404
        %vm1411 = vweird.f32 %v1405
        %vm1412 = vmor %vm1410, %vm1411
        %v1413 = vsel %vm1412, %v1405, %v1409
        %v1414 = vand.u32 2147483647, %v1404
        %vm1415 = vcmp.eq.f32.partialorder %v1414, 8.507059e+37
        %v1416 = vand.u32 %v1404, 2147483648
        %v1417 = vor.u32 1.1754944e-38, %v1416
        %v1418 = vsel %vm1415, %v1417, %v1413
        %v1419 = vmul.f32 1.0, %v1418
        %v1420 = vadd.f32 %v1338, %v1378
        %v1421 = vxor.u32 %v1420, 2147483648
        %v1422 = vmul.f32 %v1421, 1.442695
        %v1423 = vpow.pop %v1422
        %v1424 = vadd.f32 %v1423, 1.0
        %v1425 = vrcp.pop %v1424
        %v1426 = vmul.f32 %v1424, %v1425
        %v1427 = vsub.f32 1.0, %v1426
        %v1428 = vmul.f32 %v1425, %v1427
        %v1429 = vadd.f32 %v1425, %v1428
        %vm1430 = vweird.f32 %v1424
        %vm1431 = vweird.f32 %v1425
        %vm1432 = vmor %vm1430, %vm1431
        %v1433 = vsel %vm1432, %v1425, %v1429
        %v1434 = vand.u32 2147483647, %v1424
        %vm1435 = vcmp.eq.f32.partialorder %v1434, 8.507059e+37
        %v1436 = vand.u32 %v1424, 2147483648
        %v1437 = vor.u32 1.1754944e-38, %v1436
        %v1438 = vsel %vm1435, %v1437, %v1433
        %v1439 = vmul.f32 1.0, %v1438
        %v1440 = vadd.f32 %v1398, %v718
        %v1441 = vmul.f32 %v1419, %v1440
        %v1442 = vadd.f32 %v1339, %v1441
        %v1443 = vtanh.pop %v1442
        %v1444 = vsub.f32 1.0, %v1439
        %v1445 = vmul.f32 %v1444, %v1443
        %v1446 = vmul.f32 %v1439, %v1333
        %v1447 = vadd.f32 %v1445, %v1446
        %s1448 = sadd.s32 %s728, 6
        %p1449 = scmp.lt.s32.totalorder %s1448, 12
        %s1450 = scalar_select %p1449, 1, 0
        %v1451 = vstv %s1450
        %vm1452 = vcmp.eq.s32.totalorder %v1451, 1
        %v1453 = vsel %vm1452, %v1447, %v1333
        %s1454 = smul.u32 7, 3
        %s1455 = smul.addr %s1454, 8
        %s1456 = scalar_lea.vmem [#allocation2], %s1455
        %v1457 = vld [vmem:[%s1456] sm:$0xff]
        %v1458 = vld [vmem:[%s1456 + $0x8] sm:$0xff]
        %v1459 = vld [vmem:[%s1456 + $0x10] sm:$0xff]
        %1460 = vmatpush.msra.mxu0 %v613
        %1461 = vmatpush.msra.mxu0 %v610
        %1462 = vmatpush.msra.mxu0 %v607
        %1463 = vmatpush.msra.mxu0 %v604
        %1464 = vmatpush.msra.mxu0 %v601
        %1465 = vmatpush.msra.mxu0 %v598
        %1466 = vmatpush.msra.mxu0 %v595
        %1467 = vmatpush.msra.mxu0 %v592
        %1468 = vmatpush.msra.mxu0 %v589
        %1469 = vmatpush.msra.mxu0 %v586
        %1470 = vmatpush.msra.mxu0 %v583
        %1471 = vmatpush.msra.mxu0 %v580
        %1472 = vmatpush.msra.mxu0 %v577
        %1473 = vmatpush.msra.mxu0 %v574
        %1474 = vmatpush.msra.mxu0 %v571
        %1475 = vmatpush.msra.mxu0 %v568
        %1476 = vmatmul.f32.gmra.mxu0 %v1453
        %v1477 = vpop.f32.mrf.mxu0
        %v1478 = vadd.f32 0.0, %v1477
        %1479 = vdwg.mxu0
        %1480 = vmatpush.msra.mxu0 %v614
        %1481 = vmatpush.msra.mxu0 %v611
        %1482 = vmatpush.msra.mxu0 %v608
        %1483 = vmatpush.msra.mxu0 %v605
        %1484 = vmatpush.msra.mxu0 %v602
        %1485 = vmatpush.msra.mxu0 %v599
        %1486 = vmatpush.msra.mxu0 %v596
        %1487 = vmatpush.msra.mxu0 %v593
        %1488 = vmatpush.msra.mxu0 %v590
        %1489 = vmatpush.msra.mxu0 %v587
        %1490 = vmatpush.msra.mxu0 %v584
        %1491 = vmatpush.msra.mxu0 %v581
        %1492 = vmatpush.msra.mxu0 %v578
        %1493 = vmatpush.msra.mxu0 %v575
        %1494 = vmatpush.msra.mxu0 %v572
        %1495 = vmatpush.msra.mxu0 %v569
        %1496 = vmatmul.f32.gmra.mxu0 %v1453
        %v1497 = vpop.f32.mrf.mxu0
        %v1498 = vadd.f32 0.0, %v1497
        %1499 = vdwg.mxu0
        %1500 = vmatpush.msra.mxu0 %v615
        %1501 = vmatpush.msra.mxu0 %v612
        %1502 = vmatpush.msra.mxu0 %v609
        %1503 = vmatpush.msra.mxu0 %v606
        %1504 = vmatpush.msra.mxu0 %v603
        %1505 = vmatpush.msra.mxu0 %v600
        %1506 = vmatpush.msra.mxu0 %v597
        %1507 = vmatpush.msra.mxu0 %v594
        %1508 = vmatpush.msra.mxu0 %v591
        %1509 = vmatpush.msra.mxu0 %v588
        %1510 = vmatpush.msra.mxu0 %v585
        %1511 = vmatpush.msra.mxu0 %v582
        %1512 = vmatpush.msra.mxu0 %v579
        %1513 = vmatpush.msra.mxu0 %v576
        %1514 = vmatpush.msra.mxu0 %v573
        %1515 = vmatpush.msra.mxu0 %v570
        %1516 = vmatmul.f32.gmra.mxu0 %v1453
        %v1517 = vpop.f32.mrf.mxu0
        %v1518 = vadd.f32 0.0, %v1517
        %1519 = vdwg.mxu0
        %v1520 = vadd.f32 %v1457, %v1478
        %v1521 = vxor.u32 %v1520, 2147483648
        %v1522 = vmul.f32 %v1521, 1.442695
        %v1523 = vpow.pop %v1522
        %v1524 = vadd.f32 %v1523, 1.0
        %v1525 = vrcp.pop %v1524
        %v1526 = vmul.f32 %v1524, %v1525
        %v1527 = vsub.f32 1.0, %v1526
        %v1528 = vmul.f32 %v1525, %v1527
        %v1529 = vadd.f32 %v1525, %v1528
        %vm1530 = vweird.f32 %v1524
        %vm1531 = vweird.f32 %v1525
        %vm1532 = vmor %vm1530, %vm1531
        %v1533 = vsel %vm1532, %v1525, %v1529
        %v1534 = vand.u32 2147483647, %v1524
        %vm1535 = vcmp.eq.f32.partialorder %v1534, 8.507059e+37
        %v1536 = vand.u32 %v1524, 2147483648
        %v1537 = vor.u32 1.1754944e-38, %v1536
        %v1538 = vsel %vm1535, %v1537, %v1533
        %v1539 = vmul.f32 1.0, %v1538
        %v1540 = vadd.f32 %v1458, %v1498
        %v1541 = vxor.u32 %v1540, 2147483648
        %v1542 = vmul.f32 %v1541, 1.442695
        %v1543 = vpow.pop %v1542
        %v1544 = vadd.f32 %v1543, 1.0
        %v1545 = vrcp.pop %v1544
        %v1546 = vmul.f32 %v1544, %v1545
        %v1547 = vsub.f32 1.0, %v1546
        %v1548 = vmul.f32 %v1545, %v1547
        %v1549 = vadd.f32 %v1545, %v1548
        %vm1550 = vweird.f32 %v1544
        %vm1551 = vweird.f32 %v1545
        %vm1552 = vmor %vm1550, %vm1551
        %v1553 = vsel %vm1552, %v1545, %v1549
        %v1554 = vand.u32 2147483647, %v1544
        %vm1555 = vcmp.eq.f32.partialorder %v1554, 8.507059e+37
        %v1556 = vand.u32 %v1544, 2147483648
        %v1557 = vor.u32 1.1754944e-38, %v1556
        %v1558 = vsel %vm1555, %v1557, %v1553
        %v1559 = vmul.f32 1.0, %v1558
        %v1560 = vadd.f32 %v1518, %v718
        %v1561 = vmul.f32 %v1539, %v1560
        %v1562 = vadd.f32 %v1459, %v1561
        %v1563 = vtanh.pop %v1562
        %v1564 = vsub.f32 1.0, %v1559
        %v1565 = vmul.f32 %v1564, %v1563
        %v1566 = vmul.f32 %v1559, %v1453
        %v1567 = vadd.f32 %v1565, %v1566
        %s1568 = sadd.s32 %s728, 7
        %p1569 = scmp.lt.s32.totalorder %s1568, 12
        %s1570 = scalar_select %p1569, 1, 0
        %v1571 = vstv %s1570
        %vm1572 = vcmp.eq.s32.totalorder %v1571, 1
        %v1573 = vsel %vm1572, %v1567, %v1453
        %1574 = vst [vmem:[%s264] sm:$0xff] %v1573
        %p1575 = scmp.lt.s32.totalorder %s21, 0
        %s1576 = scalar_select %p1575, %s21, 0
        %s1577 = smul.addr %s1576, 8
        %s1578 = scalar_lea.vmem %s5, %s1577
        // Predicated region
        $region49: #{sequence_encoder_forward.1} parent=39 // pred_check
          %p1579 = pneg %p159
        $region50: #{sequence_encoder_forward.1} parent=39 // pred_check_branch
          %1581 = sbr.rel (%p1579) target = $region52
        $region51: #{sequence_encoder_forward.1} parent=39 // pred_region
          _
        $region52: #{sequence_encoder_forward.1} parent=39 // pred_fallthru
          _
        // Predicated region
        $region53: #{sequence_encoder_forward.1} parent=39 // pred_check
          %p1582 = pneg %p159
        $region54: #{sequence_encoder_forward.1} parent=39 // pred_check_branch
          %1584 = sbr.rel (%p1582) target = $region56
        $region55: #{sequence_encoder_forward.1} parent=39 // pred_region
          %p1585 = scmp.lt.s32.totalorder %s21, 0
          %s1586 = scalar_select %p1585, %s21, 0
          %s1587 = smul.addr %s1586, 8
          %s1588 = scalar_lea.vmem %s5, %s1587
        $region56: #{sequence_encoder_forward.1} parent=39 // pred_fallthru
          _
      $region40: #{sequence_encoder_forward.1} parent=5 // pred_fallthru
        _
      %p1589 = scmp.le.s32.totalorder 2, %s12
      // Predicated region
      $region57: #{sequence_encoder_forward.1} parent=5 // pred_check
        %p1590 = pneg %p1589
      $region58: #{sequence_encoder_forward.1} parent=5 // pred_check_branch
        %1592 = sbr.rel (%p1590) target = $region60
      $region59: #{sequence_encoder_forward.1} parent=5 // pred_region
        %s1593 = ssub.s32 %s12, 2
      $region60: #{sequence_encoder_forward.1} parent=5 // pred_fallthru
        _
    $region6: #{sequence_encoder_forward.1} parent=1 // loop_footer
      %s16 = sadd.s32 1, %s12
    $region7: #{sequence_encoder_forward.1} parent=1 // loop_footer_branch
      %11 = sbr.rel target = $region3
    $region8: #{sequence_encoder_forward.1} parent=1 // loop_exit
      _
    %1594 = vsyncpa [#allocation4], 1
    %s1595 = scalar_lea.sflag [#allocation4], 1
    %1596 = vsyncpa %s1595, 1

</llo_original>
